<compile_context>
chip_gen: v6e
topology: v6e:2x2x1
jax: 0.10.0
libtpu: 0.0.40
codegen_flags: <defaults>
</compile_context>

<pallas_src>
import functools
import math

import jax
import jax.numpy as jnp
from jax import lax
from jax.experimental import pallas as pl
from jax.experimental.pallas import tpu as pltpu

_LN_EPS = 1e-5            # torch.nn.LayerNorm default eps
_LANE = 128

# Row order of the f32 "vector" parameters inside the per-layer (8, 128) slab.
_V_ROWS = ("ln1_w", "ln1_b", "bqkv", "bo", "ln2_w", "ln2_b", "b1", "b2")


def _round_up(n, m=_LANE):
    return ((n + m - 1) // m) * m


def _w_layout(e):
    """(lane_offset, width) of each matmul weight inside the per-layer bf16 slab."""
    h = 4 * e
    segs = (("w1", h), ("w2t", h), ("wqkv", 3 * e), ("wo", e))
    layout, off = {}, 0
    for name, width in segs:
        layout[name] = (off, width)
        off += _round_up(width)        # keep every slice start 128-lane aligned
    return layout, off


def _layernorm(x, w, b):
    """One-pass biased-variance LayerNorm (two independent lane reductions)."""
    mu = jnp.mean(x, axis=-1, keepdims=True)
    msq = jnp.mean(x * x, axis=-1, keepdims=True)
    var = msq - mu * mu
    return (x - mu) * lax.rsqrt(var + _LN_EPS) * w + b


def fused_bert_kernel(x_ref, w_ref, v_ref, o_ref, *,
                      num_layers, n_batch, seq_len, embed_dim):
    """Whole forward (all layers + final batch mean) in one grid-less call.

    x_ref: (L*N, E) f32, seq-major (row l*N + n = token l of batch element n).
    w_ref: (num_layers, E, W_LANES) bf16 packed matmul weights.
    v_ref: (num_layers, 8, 128) f32 packed LN params / biases.
    o_ref: (L, E) f32 = mean over the N batch elements of the final activations.
    """
    f32, bf16 = jnp.float32, jnp.bfloat16
    e = embed_dim
    hdim = 4 * e
    m = n_batch * seq_len
    scale = 1.0 / math.sqrt(e)                 # num_heads = 1 -> head_dim = E
    layout, _ = _w_layout(e)

    x = x_ref[...]                             # (M, E) f32

    # ---- static masks / constants (hoisted out of the layer loop) ----------
    # Block-diagonal attention mask in the seq-major layout:
    #   row i may attend to col j  iff  i ≡ j (mod N)  (same batch element).
    # Built with float math only (exact for these tiny indices; avoids int div).
    ri = lax.broadcasted_iota(jnp.int32, (m, m), 0).astype(f32)
    ci = lax.broadcasted_iota(jnp.int32, (m, m), 1).astype(f32)
    d = (ri - ci) / n_batch
    same_batch = d == jnp.floor(d)
    neg_big = jnp.float32(-1e30)

    # Constant averaging matrix for the final x.mean(dim=-2):
    #   out[l] = (1/N) * sum_n x[l*N + n]
    li = lax.broadcasted_iota(jnp.int32, (seq_len, m), 0).astype(f32)
    rj = lax.broadcasted_iota(jnp.int32, (seq_len, m), 1).astype(f32)
    avg = jnp.where(jnp.floor(rj / n_batch) == li,
                    1.0 / n_batch, 0.0).astype(f32)

    for layer in range(num_layers):            # static unroll over layers
        wl = w_ref[layer]                      # (E, W_LANES) bf16
        vl = v_ref[layer]                      # (8, 128)     f32
        o1, s1 = layout["w1"];   w1 = wl[:, o1:o1 + s1]       # (E, 4E)
        o2, s2 = layout["w2t"];  w2t = wl[:, o2:o2 + s2]      # (E, 4E) == W2^T
        oq, sq = layout["wqkv"]; wqkv = wl[:, oq:oq + sq]     # (E, 3E)
        oo, so = layout["wo"];   wo = wl[:, oo:oo + so]       # (E, E)
        ln1w = vl[0:1, :e];      ln1b = vl[1:2, :e]
        bqkv = vl[2:3, :3 * e];  bo = vl[3:4, :e]
        ln2w = vl[4:5, :e];      ln2b = vl[5:6, :e]
        b1 = vl[6:7, :hdim];     b2 = vl[7:8, :e]

        # ---- attention block: x = MHA(LN1(x)) + x ---------------------------
        residual = x
        hn = _layernorm(x, ln1w, ln1b)                            # (M, E) f32
        qkv = jnp.dot(hn.astype(bf16), wqkv,
                      preferred_element_type=f32) + bqkv          # (M, 3E) f32
        # Lane slices at 0/E/2E are sub-128-lane; the shuffles land on the XLU
        # which has slack here (verify-then-fix per review opt #9).
        q = qkv[:, :e].astype(bf16)
        k = qkv[:, e:2 * e].astype(bf16)
        v = qkv[:, 2 * e:3 * e].astype(bf16)

        # single block-diagonal score / context pair (no per-batch unroll)
        s = lax.dot_general(q, k, (((1,), (1,)), ((), ())),
                            preferred_element_type=f32) * scale   # (M, M)
        s = jnp.where(same_batch, s, neg_big)    # mask BEFORE row-max / exp
        s = s - jnp.max(s, axis=-1, keepdims=True)
        p = jnp.exp(s)
        denom = jnp.sum(p, axis=-1, keepdims=True)
        attn = p * pl.reciprocal(denom, approx=True)              # softmax
        ctx = jnp.dot(attn.astype(bf16), v,
                      preferred_element_type=f32)                 # (M, E)

        attn_out = jnp.dot(ctx.astype(bf16), wo,
                           preferred_element_type=f32) + bo
        x = attn_out + residual

        # ---- FFN block: x = x + FFN(LN2(x)), FFN(y) = y + W2 relu(W1 y + b1) + b2
        y = _layernorm(x, ln2w, ln2b)
        h1 = jnp.maximum(jnp.dot(y.astype(bf16), w1,
                                 preferred_element_type=f32) + b1, 0.0)
        h2 = lax.dot_general(h1.astype(bf16), w2t, (((1,), (1,)), ((), ())),
                             preferred_element_type=f32) + b2
        x = x + y + h2                           # inner FFN residual (y) per spec

    # ---- final x.mean(dim=-2): mean over the N interleaved batch rows ------
    o_ref[...] = jnp.dot(avg, x, preferred_element_type=f32)


@jax.jit
def bert_feature_extraction(x_lne, w_slab, v_slab):
    """x_lne: (L, N, E) in PyTorch MultiheadAttention layout -> (L, E)."""
    l, n, e = x_lne.shape
    num_layers = w_slab.shape[0]
    # seq-major flatten is a pure view (no XLA transpose / copy kernel)
    x2d = x_lne.reshape(l * n, e).astype(jnp.float32)
    vmem = pl.BlockSpec(memory_space=pltpu.MemorySpace.VMEM)
    kernel = functools.partial(fused_bert_kernel, num_layers=num_layers,
                               n_batch=n, seq_len=l, embed_dim=e)
    return pl.pallas_call(
        kernel,
        out_shape=jax.ShapeDtypeStruct((l, e), jnp.float32),
        in_specs=[vmem, vmem, vmem],
        out_specs=vmem,
    )(x2d, w_slab, v_slab)


def init_params(key, embed_dim, num_layers):
    """Deterministic synthetic parameters in natural (math) layout, f32.

    Matmul weights are rounded through bf16 so the in-kernel bf16 cast is exact.
    # TODO(synk): when loading real checkpoints, split/transpose the packed
    # in_proj_weight of torch.nn.MultiheadAttention into wqkv accordingly.
    """
    e = embed_dim
    h = 4 * e
    f32, bf16 = jnp.float32, jnp.bfloat16

    def w_init(k, shape, s=0.05):
        return (s * jax.random.normal(k, shape, f32)).astype(bf16).astype(f32)

    layers = []
    for k in jax.random.split(key, num_layers):
        ks = jax.random.split(k, 12)
        layers.append({
            "ln1_w": 1.0 + 0.1 * jax.random.normal(ks[0], (e,), f32),
            "ln1_b": 0.1 * jax.random.normal(ks[1], (e,), f32),
            "wqkv": w_init(ks[2], (e, 3 * e)),
            "bqkv": 0.02 * jax.random.normal(ks[3], (3 * e,), f32),
            "wo": w_init(ks[4], (e, e)),
            "bo": 0.02 * jax.random.normal(ks[5], (e,), f32),
            "ln2_w": 1.0 + 0.1 * jax.random.normal(ks[6], (e,), f32),
            "ln2_b": 0.1 * jax.random.normal(ks[7], (e,), f32),
            "w1": w_init(ks[8], (e, h)),
            "b1": 0.02 * jax.random.normal(ks[9], (h,), f32),
            "w2": w_init(ks[10], (h, e)),
            "b2": 0.02 * jax.random.normal(ks[11], (e,), f32),
        })
    return {name: jnp.stack([lp[name] for lp in layers]) for name in layers[0]}


def pack_params(params):
    """Pack the 12 per-layer parameters into two contiguous slabs (done once)."""
    nl, e, _ = params["wo"].shape
    layout, total = _w_layout(e)

    def seg(a):                       # (nl, e, w) -> lane-padded to 128 multiple
        w = a.shape[-1]
        return jnp.pad(a, ((0, 0), (0, 0), (0, _round_up(w) - w)))

    w_slab = jnp.concatenate([
        seg(params["w1"]),
        seg(jnp.swapaxes(params["w2"], 1, 2)),   # store W2 transposed: (E, 4E)
        seg(params["wqkv"]),
        seg(params["wo"]),
    ], axis=-1).astype(jnp.bfloat16)             # (nl, E, total) bf16
    assert w_slab.shape[-1] == total

    vlanes = _round_up(max(params[n].shape[-1] for n in _V_ROWS))
    v_rows = [jnp.pad(params[n], ((0, 0), (0, vlanes - params[n].shape[-1])))[:, None, :]
              for n in _V_ROWS]
    v_slab = jnp.concatenate(v_rows, axis=1).astype(jnp.float32)  # (nl, 8, 128)
    return w_slab, v_slab


def _reference(x_lne, params):
    """Pure-jnp forward (all-f32 math) matching the PyTorch module semantics."""
    l, n, e = x_lne.shape
    num_layers = params["wqkv"].shape[0]
    scale = 1.0 / math.sqrt(e)

    def ln(v, w, b):
        mu = v.mean(-1, keepdims=True)
        var = ((v - mu) ** 2).mean(-1, keepdims=True)
        return (v - mu) / jnp.sqrt(var + _LN_EPS) * w + b

    x = x_lne.astype(jnp.float32)                           # (L, N, E)
    for i in range(num_layers):
        residual = x
        h = ln(x, params["ln1_w"][i], params["ln1_b"][i])
        qkv = h @ params["wqkv"][i] + params["bqkv"][i]
        q, k, v = qkv[..., :e], qkv[..., e:2 * e], qkv[..., 2 * e:]
        s = jnp.einsum("ind,jnd->nij", q, k) * scale
        attn = jax.nn.softmax(s, axis=-1)
        ctx = jnp.einsum("nij,jnd->ind", attn, v)           # (L, N, E)
        x = ctx @ params["wo"][i] + params["bo"][i] + residual

        y = ln(x, params["ln2_w"][i], params["ln2_b"][i])
        h1 = jnp.maximum(y @ params["w1"][i] + params["b1"][i], 0.0)
        h2 = h1 @ params["w2"][i] + params["b2"][i]
        x = x + y + h2
    return x.mean(axis=-2)                                  # (L, E)


if __name__ == "__main__":
    L, N, E, NUM_LAYERS = 8, 2, 32, 2   # seq, batch, embedding_dim, num_layer
    key = jax.random.PRNGKey(0)
    kx, kp = jax.random.split(key)
    x = jax.random.normal(kx, (L, N, E), jnp.float32)
    params = init_params(kp, E, NUM_LAYERS)
    w_slab, v_slab = pack_params(params)

    out = jax.block_until_ready(bert_feature_extraction(x, w_slab, v_slab))
    assert out.shape == (L, E), out.shape
    assert bool(jnp.all(jnp.isfinite(out)))

    ref = _reference(x, params)
    max_err = float(jnp.max(jnp.abs(out - ref)))
    assert max_err < 3e-2, f"max abs err {max_err} vs pure-JAX reference"
    print("KERNEL_OK")
</pallas_src>

<mosaic_0001>
module attributes {stable_mosaic.version = 11 : i64} {
  func.func @fused_bert_kernel(%arg0: memref<16x32xf32, #tpu.memory_space<vmem>>, %arg1: memref<2x32x512xbf16, #tpu.memory_space<vmem>>, %arg2: memref<2x8x128xf32, #tpu.memory_space<vmem>>, %arg3: memref<8x32xf32, #tpu.memory_space<vmem>>) attributes {dimension_semantics = [], scalar_prefetch = 0 : i64, scratch_operands = 0 : i64, tpu.core_type = #tpu.core_type<tc>} {
    %c0 = arith.constant 0 : index
    %c0_0 = arith.constant 0 : index
    %0 = vector.load %arg0[%c0, %c0_0] : memref<16x32xf32, #tpu.memory_space<vmem>>, vector<16x32xf32>
    %1 = tpu.iota {dimensions = array<i32: 0>} : vector<16x16xi32>
    %2 = arith.sitofp %1 : vector<16x16xi32> to vector<16x16xf32>
    %3 = tpu.iota {dimensions = array<i32: 1>} : vector<16x16xi32>
    %4 = arith.sitofp %3 : vector<16x16xi32> to vector<16x16xf32>
    %5 = arith.subf %2, %4 : vector<16x16xf32>
    %cst = arith.constant 2.000000e+00 : f32
    %6 = vector.broadcast %cst : f32 to vector<16x16xf32>
    %7 = arith.divf %5, %6 : vector<16x16xf32>
    %8 = math.floor %7 : vector<16x16xf32>
    %9 = arith.cmpf oeq, %7, %8 : vector<16x16xf32>
    %10 = tpu.iota {dimensions = array<i32: 0>} : vector<8x16xi32>
    %11 = arith.sitofp %10 : vector<8x16xi32> to vector<8x16xf32>
    %12 = tpu.iota {dimensions = array<i32: 1>} : vector<8x16xi32>
    %13 = arith.sitofp %12 : vector<8x16xi32> to vector<8x16xf32>
    %cst_1 = arith.constant 2.000000e+00 : f32
    %14 = vector.broadcast %cst_1 : f32 to vector<8x16xf32>
    %15 = arith.divf %13, %14 : vector<8x16xf32>
    %16 = math.floor %15 : vector<8x16xf32>
    %17 = arith.cmpf oeq, %16, %11 : vector<8x16xf32>
    %cst_2 = arith.constant 5.000000e-01 : f32
    %cst_3 = arith.constant 0.000000e+00 : f32
    %18 = vector.broadcast %cst_2 : f32 to vector<8x16xf32>
    %19 = vector.broadcast %cst_3 : f32 to vector<8x16xf32>
    %20 = arith.select %17, %18, %19 : vector<8x16xi1>, vector<8x16xf32>
    %c0_4 = arith.constant 0 : index
    %c0_5 = arith.constant 0 : index
    %c0_6 = arith.constant 0 : index
    %21 = vector.load %arg1[%c0_4, %c0_5, %c0_6] : memref<2x32x512xbf16, #tpu.memory_space<vmem>>, vector<1x32x512xbf16>
    %22 = vector.shape_cast %21 : vector<1x32x512xbf16> to vector<32x512xbf16>
    %c0_7 = arith.constant 0 : index
    %c0_8 = arith.constant 0 : index
    %c0_9 = arith.constant 0 : index
    %23 = vector.load %arg2[%c0_7, %c0_8, %c0_9] : memref<2x8x128xf32, #tpu.memory_space<vmem>>, vector<1x8x128xf32>
    %24 = vector.shape_cast %23 : vector<1x8x128xf32> to vector<8x128xf32>
    %25 = vector.extract_strided_slice %22 {offsets = [0, 0], sizes = [32, 128], strides = [1, 1]} : vector<32x512xbf16> to vector<32x128xbf16>
    %26 = vector.extract_strided_slice %22 {offsets = [0, 128], sizes = [32, 128], strides = [1, 1]} : vector<32x512xbf16> to vector<32x128xbf16>
    %27 = vector.extract_strided_slice %22 {offsets = [0, 256], sizes = [32, 96], strides = [1, 1]} : vector<32x512xbf16> to vector<32x96xbf16>
    %28 = vector.extract_strided_slice %22 {offsets = [0, 384], sizes = [32, 32], strides = [1, 1]} : vector<32x512xbf16> to vector<32x32xbf16>
    %29 = vector.extract_strided_slice %24 {offsets = [0, 0], sizes = [1, 32], strides = [1, 1]} : vector<8x128xf32> to vector<1x32xf32>
    %30 = vector.extract_strided_slice %24 {offsets = [1, 0], sizes = [1, 32], strides = [1, 1]} : vector<8x128xf32> to vector<1x32xf32>
    %31 = vector.extract_strided_slice %24 {offsets = [2, 0], sizes = [1, 96], strides = [1, 1]} : vector<8x128xf32> to vector<1x96xf32>
    %32 = vector.extract_strided_slice %24 {offsets = [3, 0], sizes = [1, 32], strides = [1, 1]} : vector<8x128xf32> to vector<1x32xf32>
    %33 = vector.extract_strided_slice %24 {offsets = [4, 0], sizes = [1, 32], strides = [1, 1]} : vector<8x128xf32> to vector<1x32xf32>
    %34 = vector.extract_strided_slice %24 {offsets = [5, 0], sizes = [1, 32], strides = [1, 1]} : vector<8x128xf32> to vector<1x32xf32>
    %35 = vector.extract_strided_slice %24 {offsets = [6, 0], sizes = [1, 128], strides = [1, 1]} : vector<8x128xf32> to vector<1x128xf32>
    %36 = vector.extract_strided_slice %24 {offsets = [7, 0], sizes = [1, 32], strides = [1, 1]} : vector<8x128xf32> to vector<1x32xf32>
    %cst_10 = arith.constant dense<0.000000e+00> : vector<16xf32>
    %37 = vector.multi_reduction <add>, %0, %cst_10 [1] : vector<16x32xf32> to vector<16xf32>
    %38 = vector.shape_cast %37 : vector<16xf32> to vector<16x1xf32>
    %cst_11 = arith.constant 3.200000e+01 : f32
    %39 = vector.broadcast %cst_11 : f32 to vector<16x1xf32>
    %40 = arith.divf %38, %39 : vector<16x1xf32>
    %41 = arith.mulf %0, %0 : vector<16x32xf32>
    %cst_12 = arith.constant dense<0.000000e+00> : vector<16xf32>
    %42 = vector.multi_reduction <add>, %41, %cst_12 [1] : vector<16x32xf32> to vector<16xf32>
    %43 = vector.shape_cast %42 : vector<16xf32> to vector<16x1xf32>
    %cst_13 = arith.constant 3.200000e+01 : f32
    %44 = vector.broadcast %cst_13 : f32 to vector<16x1xf32>
    %45 = arith.divf %43, %44 : vector<16x1xf32>
    %46 = arith.mulf %40, %40 : vector<16x1xf32>
    %47 = arith.subf %45, %46 : vector<16x1xf32>
    %48 = vector.broadcast %40 : vector<16x1xf32> to vector<16x32xf32>
    %49 = arith.subf %0, %48 : vector<16x32xf32>
    %cst_14 = arith.constant 9.99999974E-6 : f32
    %50 = vector.broadcast %cst_14 : f32 to vector<16x1xf32>
    %51 = arith.addf %47, %50 : vector<16x1xf32>
    %52 = math.rsqrt %51 : vector<16x1xf32>
    %53 = vector.broadcast %52 : vector<16x1xf32> to vector<16x32xf32>
    %54 = arith.mulf %49, %53 : vector<16x32xf32>
    %55 = vector.broadcast %29 : vector<1x32xf32> to vector<16x32xf32>
    %56 = arith.mulf %54, %55 : vector<16x32xf32>
    %57 = vector.broadcast %30 : vector<1x32xf32> to vector<16x32xf32>
    %58 = arith.addf %56, %57 : vector<16x32xf32>
    %59 = arith.truncf %58 : vector<16x32xf32> to vector<16x32xbf16>
    %cst_15 = arith.constant dense<0.000000e+00> : vector<16x96xf32>
    %60 = tpu.matmul %59, %27, %cst_15 {dimension_numbers = #tpu.dot_dimension_numbers<[1], [0], [0], [1], [0, 0, 1, 1], [], []>} : vector<16x32xbf16>, vector<32x96xbf16>, vector<16x96xf32> -> vector<16x96xf32>
    %61 = vector.broadcast %31 : vector<1x96xf32> to vector<16x96xf32>
    %62 = arith.addf %60, %61 : vector<16x96xf32>
    %63 = vector.extract_strided_slice %62 {offsets = [0, 0], sizes = [16, 32], strides = [1, 1]} : vector<16x96xf32> to vector<16x32xf32>
    %64 = arith.truncf %63 : vector<16x32xf32> to vector<16x32xbf16>
    %65 = vector.extract_strided_slice %62 {offsets = [0, 32], sizes = [16, 32], strides = [1, 1]} : vector<16x96xf32> to vector<16x32xf32>
    %66 = arith.truncf %65 : vector<16x32xf32> to vector<16x32xbf16>
    %67 = vector.extract_strided_slice %62 {offsets = [0, 64], sizes = [16, 32], strides = [1, 1]} : vector<16x96xf32> to vector<16x32xf32>
    %68 = arith.truncf %67 : vector<16x32xf32> to vector<16x32xbf16>
    %cst_16 = arith.constant dense<0.000000e+00> : vector<16x16xf32>
    %69 = tpu.matmul %64, %66, %cst_16 {dimension_numbers = #tpu.dot_dimension_numbers<[1], [1], [0], [0], [0, 0, 1, 0], [], []>} : vector<16x32xbf16>, vector<16x32xbf16>, vector<16x16xf32> -> vector<16x16xf32>
    %cst_17 = arith.constant 0.176776692 : f32
    %70 = vector.broadcast %cst_17 : f32 to vector<16x16xf32>
    %71 = arith.mulf %69, %70 : vector<16x16xf32>
    %cst_18 = arith.constant -1.000000e+30 : f32
    %72 = vector.broadcast %cst_18 : f32 to vector<16x16xf32>
    %73 = arith.select %9, %71, %72 : vector<16x16xi1>, vector<16x16xf32>
    %cst_19 = arith.constant dense<0xFF800000> : vector<16xf32>
    %74 = vector.multi_reduction <maximumf>, %73, %cst_19 [1] : vector<16x16xf32> to vector<16xf32>
    %75 = vector.shape_cast %74 : vector<16xf32> to vector<16x1xf32>
    %76 = vector.broadcast %75 : vector<16x1xf32> to vector<16x16xf32>
    %77 = arith.subf %73, %76 : vector<16x16xf32>
    %78 = math.exp %77 : vector<16x16xf32>
    %cst_20 = arith.constant dense<0.000000e+00> : vector<16xf32>
    %79 = vector.multi_reduction <add>, %78, %cst_20 [1] : vector<16x16xf32> to vector<16xf32>
    %80 = vector.shape_cast %79 : vector<16xf32> to vector<16x1xf32>
    %81 = tpu.reciprocal %80 {approx = true} : vector<16x1xf32> -> vector<16x1xf32>
    %82 = vector.broadcast %81 : vector<16x1xf32> to vector<16x16xf32>
    %83 = arith.mulf %78, %82 : vector<16x16xf32>
    %84 = arith.truncf %83 : vector<16x16xf32> to vector<16x16xbf16>
    %cst_21 = arith.constant dense<0.000000e+00> : vector<16x32xf32>
    %85 = tpu.matmul %84, %68, %cst_21 {dimension_numbers = #tpu.dot_dimension_numbers<[1], [0], [0], [1], [0, 0, 1, 1], [], []>} : vector<16x16xbf16>, vector<16x32xbf16>, vector<16x32xf32> -> vector<16x32xf32>
    %86 = arith.truncf %85 : vector<16x32xf32> to vector<16x32xbf16>
    %cst_22 = arith.constant dense<0.000000e+00> : vector<16x32xf32>
    %87 = tpu.matmul %86, %28, %cst_22 {dimension_numbers = #tpu.dot_dimension_numbers<[1], [0], [0], [1], [0, 0, 1, 1], [], []>} : vector<16x32xbf16>, vector<32x32xbf16>, vector<16x32xf32> -> vector<16x32xf32>
    %88 = vector.broadcast %32 : vector<1x32xf32> to vector<16x32xf32>
    %89 = arith.addf %87, %88 : vector<16x32xf32>
    %90 = arith.addf %89, %0 : vector<16x32xf32>
    %cst_23 = arith.constant dense<0.000000e+00> : vector<16xf32>
    %91 = vector.multi_reduction <add>, %90, %cst_23 [1] : vector<16x32xf32> to vector<16xf32>
    %92 = vector.shape_cast %91 : vector<16xf32> to vector<16x1xf32>
    %cst_24 = arith.constant 3.200000e+01 : f32
    %93 = vector.broadcast %cst_24 : f32 to vector<16x1xf32>
    %94 = arith.divf %92, %93 : vector<16x1xf32>
    %95 = arith.mulf %90, %90 : vector<16x32xf32>
    %cst_25 = arith.constant dense<0.000000e+00> : vector<16xf32>
    %96 = vector.multi_reduction <add>, %95, %cst_25 [1] : vector<16x32xf32> to vector<16xf32>
    %97 = vector.shape_cast %96 : vector<16xf32> to vector<16x1xf32>
    %cst_26 = arith.constant 3.200000e+01 : f32
    %98 = vector.broadcast %cst_26 : f32 to vector<16x1xf32>
    %99 = arith.divf %97, %98 : vector<16x1xf32>
    %100 = arith.mulf %94, %94 : vector<16x1xf32>
    %101 = arith.subf %99, %100 : vector<16x1xf32>
    %102 = vector.broadcast %94 : vector<16x1xf32> to vector<16x32xf32>
    %103 = arith.subf %90, %102 : vector<16x32xf32>
    %cst_27 = arith.constant 9.99999974E-6 : f32
    %104 = vector.broadcast %cst_27 : f32 to vector<16x1xf32>
    %105 = arith.addf %101, %104 : vector<16x1xf32>
    %106 = math.rsqrt %105 : vector<16x1xf32>
    %107 = vector.broadcast %106 : vector<16x1xf32> to vector<16x32xf32>
    %108 = arith.mulf %103, %107 : vector<16x32xf32>
    %109 = vector.broadcast %33 : vector<1x32xf32> to vector<16x32xf32>
    %110 = arith.mulf %108, %109 : vector<16x32xf32>
    %111 = vector.broadcast %34 : vector<1x32xf32> to vector<16x32xf32>
    %112 = arith.addf %110, %111 : vector<16x32xf32>
    %113 = arith.truncf %112 : vector<16x32xf32> to vector<16x32xbf16>
    %cst_28 = arith.constant dense<0.000000e+00> : vector<16x128xf32>
    %114 = tpu.matmul %113, %25, %cst_28 {dimension_numbers = #tpu.dot_dimension_numbers<[1], [0], [0], [1], [0, 0, 1, 1], [], []>} : vector<16x32xbf16>, vector<32x128xbf16>, vector<16x128xf32> -> vector<16x128xf32>
    %115 = vector.broadcast %35 : vector<1x128xf32> to vector<16x128xf32>
    %116 = arith.addf %114, %115 : vector<16x128xf32>
    %cst_29 = arith.constant 0.000000e+00 : f32
    %117 = vector.broadcast %cst_29 : f32 to vector<16x128xf32>
    %118 = arith.maximumf %116, %117 : vector<16x128xf32>
    %119 = arith.truncf %118 : vector<16x128xf32> to vector<16x128xbf16>
    %cst_30 = arith.constant dense<0.000000e+00> : vector<16x32xf32>
    %120 = tpu.matmul %119, %26, %cst_30 {dimension_numbers = #tpu.dot_dimension_numbers<[1], [1], [0], [0], [0, 0, 1, 0], [], []>} : vector<16x128xbf16>, vector<32x128xbf16>, vector<16x32xf32> -> vector<16x32xf32>
    %121 = vector.broadcast %36 : vector<1x32xf32> to vector<16x32xf32>
    %122 = arith.addf %120, %121 : vector<16x32xf32>
    %123 = arith.addf %90, %112 : vector<16x32xf32>
    %124 = arith.addf %123, %122 : vector<16x32xf32>
    %c1 = arith.constant 1 : index
    %c0_31 = arith.constant 0 : index
    %c0_32 = arith.constant 0 : index
    %125 = vector.load %arg1[%c1, %c0_31, %c0_32] : memref<2x32x512xbf16, #tpu.memory_space<vmem>>, vector<1x32x512xbf16>
    %126 = vector.shape_cast %125 : vector<1x32x512xbf16> to vector<32x512xbf16>
    %c1_33 = arith.constant 1 : index
    %c0_34 = arith.constant 0 : index
    %c0_35 = arith.constant 0 : index
    %127 = vector.load %arg2[%c1_33, %c0_34, %c0_35] : memref<2x8x128xf32, #tpu.memory_space<vmem>>, vector<1x8x128xf32>
    %128 = vector.shape_cast %127 : vector<1x8x128xf32> to vector<8x128xf32>
    %129 = vector.extract_strided_slice %126 {offsets = [0, 0], sizes = [32, 128], strides = [1, 1]} : vector<32x512xbf16> to vector<32x128xbf16>
    %130 = vector.extract_strided_slice %126 {offsets = [0, 128], sizes = [32, 128], strides = [1, 1]} : vector<32x512xbf16> to vector<32x128xbf16>
    %131 = vector.extract_strided_slice %126 {offsets = [0, 256], sizes = [32, 96], strides = [1, 1]} : vector<32x512xbf16> to vector<32x96xbf16>
    %132 = vector.extract_strided_slice %126 {offsets = [0, 384], sizes = [32, 32], strides = [1, 1]} : vector<32x512xbf16> to vector<32x32xbf16>
    %133 = vector.extract_strided_slice %128 {offsets = [0, 0], sizes = [1, 32], strides = [1, 1]} : vector<8x128xf32> to vector<1x32xf32>
    %134 = vector.extract_strided_slice %128 {offsets = [1, 0], sizes = [1, 32], strides = [1, 1]} : vector<8x128xf32> to vector<1x32xf32>
    %135 = vector.extract_strided_slice %128 {offsets = [2, 0], sizes = [1, 96], strides = [1, 1]} : vector<8x128xf32> to vector<1x96xf32>
    %136 = vector.extract_strided_slice %128 {offsets = [3, 0], sizes = [1, 32], strides = [1, 1]} : vector<8x128xf32> to vector<1x32xf32>
    %137 = vector.extract_strided_slice %128 {offsets = [4, 0], sizes = [1, 32], strides = [1, 1]} : vector<8x128xf32> to vector<1x32xf32>
    %138 = vector.extract_strided_slice %128 {offsets = [5, 0], sizes = [1, 32], strides = [1, 1]} : vector<8x128xf32> to vector<1x32xf32>
    %139 = vector.extract_strided_slice %128 {offsets = [6, 0], sizes = [1, 128], strides = [1, 1]} : vector<8x128xf32> to vector<1x128xf32>
    %140 = vector.extract_strided_slice %128 {offsets = [7, 0], sizes = [1, 32], strides = [1, 1]} : vector<8x128xf32> to vector<1x32xf32>
    %cst_36 = arith.constant dense<0.000000e+00> : vector<16xf32>
    %141 = vector.multi_reduction <add>, %124, %cst_36 [1] : vector<16x32xf32> to vector<16xf32>
    %142 = vector.shape_cast %141 : vector<16xf32> to vector<16x1xf32>
    %cst_37 = arith.constant 3.200000e+01 : f32
    %143 = vector.broadcast %cst_37 : f32 to vector<16x1xf32>
    %144 = arith.divf %142, %143 : vector<16x1xf32>
    %145 = arith.mulf %124, %124 : vector<16x32xf32>
    %cst_38 = arith.constant dense<0.000000e+00> : vector<16xf32>
    %146 = vector.multi_reduction <add>, %145, %cst_38 [1] : vector<16x32xf32> to vector<16xf32>
    %147 = vector.shape_cast %146 : vector<16xf32> to vector<16x1xf32>
    %cst_39 = arith.constant 3.200000e+01 : f32
    %148 = vector.broadcast %cst_39 : f32 to vector<16x1xf32>
    %149 = arith.divf %147, %148 : vector<16x1xf32>
    %150 = arith.mulf %144, %144 : vector<16x1xf32>
    %151 = arith.subf %149, %150 : vector<16x1xf32>
    %152 = vector.broadcast %144 : vector<16x1xf32> to vector<16x32xf32>
    %153 = arith.subf %124, %152 : vector<16x32xf32>
    %cst_40 = arith.constant 9.99999974E-6 : f32
    %154 = vector.broadcast %cst_40 : f32 to vector<16x1xf32>
    %155 = arith.addf %151, %154 : vector<16x1xf32>
    %156 = math.rsqrt %155 : vector<16x1xf32>
    %157 = vector.broadcast %156 : vector<16x1xf32> to vector<16x32xf32>
    %158 = arith.mulf %153, %157 : vector<16x32xf32>
    %159 = vector.broadcast %133 : vector<1x32xf32> to vector<16x32xf32>
    %160 = arith.mulf %158, %159 : vector<16x32xf32>
    %161 = vector.broadcast %134 : vector<1x32xf32> to vector<16x32xf32>
    %162 = arith.addf %160, %161 : vector<16x32xf32>
    %163 = arith.truncf %162 : vector<16x32xf32> to vector<16x32xbf16>
    %cst_41 = arith.constant dense<0.000000e+00> : vector<16x96xf32>
    %164 = tpu.matmul %163, %131, %cst_41 {dimension_numbers = #tpu.dot_dimension_numbers<[1], [0], [0], [1], [0, 0, 1, 1], [], []>} : vector<16x32xbf16>, vector<32x96xbf16>, vector<16x96xf32> -> vector<16x96xf32>
    %165 = vector.broadcast %135 : vector<1x96xf32> to vector<16x96xf32>
    %166 = arith.addf %164, %165 : vector<16x96xf32>
    %167 = vector.extract_strided_slice %166 {offsets = [0, 0], sizes = [16, 32], strides = [1, 1]} : vector<16x96xf32> to vector<16x32xf32>
    %168 = arith.truncf %167 : vector<16x32xf32> to vector<16x32xbf16>
    %169 = vector.extract_strided_slice %166 {offsets = [0, 32], sizes = [16, 32], strides = [1, 1]} : vector<16x96xf32> to vector<16x32xf32>
    %170 = arith.truncf %169 : vector<16x32xf32> to vector<16x32xbf16>
    %171 = vector.extract_strided_slice %166 {offsets = [0, 64], sizes = [16, 32], strides = [1, 1]} : vector<16x96xf32> to vector<16x32xf32>
    %172 = arith.truncf %171 : vector<16x32xf32> to vector<16x32xbf16>
    %cst_42 = arith.constant dense<0.000000e+00> : vector<16x16xf32>
    %173 = tpu.matmul %168, %170, %cst_42 {dimension_numbers = #tpu.dot_dimension_numbers<[1], [1], [0], [0], [0, 0, 1, 0], [], []>} : vector<16x32xbf16>, vector<16x32xbf16>, vector<16x16xf32> -> vector<16x16xf32>
    %cst_43 = arith.constant 0.176776692 : f32
    %174 = vector.broadcast %cst_43 : f32 to vector<16x16xf32>
    %175 = arith.mulf %173, %174 : vector<16x16xf32>
    %cst_44 = arith.constant -1.000000e+30 : f32
    %176 = vector.broadcast %cst_44 : f32 to vector<16x16xf32>
    %177 = arith.select %9, %175, %176 : vector<16x16xi1>, vector<16x16xf32>
    %cst_45 = arith.constant dense<0xFF800000> : vector<16xf32>
    %178 = vector.multi_reduction <maximumf>, %177, %cst_45 [1] : vector<16x16xf32> to vector<16xf32>
    %179 = vector.shape_cast %178 : vector<16xf32> to vector<16x1xf32>
    %180 = vector.broadcast %179 : vector<16x1xf32> to vector<16x16xf32>
    %181 = arith.subf %177, %180 : vector<16x16xf32>
    %182 = math.exp %181 : vector<16x16xf32>
    %cst_46 = arith.constant dense<0.000000e+00> : vector<16xf32>
    %183 = vector.multi_reduction <add>, %182, %cst_46 [1] : vector<16x16xf32> to vector<16xf32>
    %184 = vector.shape_cast %183 : vector<16xf32> to vector<16x1xf32>
    %185 = tpu.reciprocal %184 {approx = true} : vector<16x1xf32> -> vector<16x1xf32>
    %186 = vector.broadcast %185 : vector<16x1xf32> to vector<16x16xf32>
    %187 = arith.mulf %182, %186 : vector<16x16xf32>
    %188 = arith.truncf %187 : vector<16x16xf32> to vector<16x16xbf16>
    %cst_47 = arith.constant dense<0.000000e+00> : vector<16x32xf32>
    %189 = tpu.matmul %188, %172, %cst_47 {dimension_numbers = #tpu.dot_dimension_numbers<[1], [0], [0], [1], [0, 0, 1, 1], [], []>} : vector<16x16xbf16>, vector<16x32xbf16>, vector<16x32xf32> -> vector<16x32xf32>
    %190 = arith.truncf %189 : vector<16x32xf32> to vector<16x32xbf16>
    %cst_48 = arith.constant dense<0.000000e+00> : vector<16x32xf32>
    %191 = tpu.matmul %190, %132, %cst_48 {dimension_numbers = #tpu.dot_dimension_numbers<[1], [0], [0], [1], [0, 0, 1, 1], [], []>} : vector<16x32xbf16>, vector<32x32xbf16>, vector<16x32xf32> -> vector<16x32xf32>
    %192 = vector.broadcast %136 : vector<1x32xf32> to vector<16x32xf32>
    %193 = arith.addf %191, %192 : vector<16x32xf32>
    %194 = arith.addf %193, %124 : vector<16x32xf32>
    %cst_49 = arith.constant dense<0.000000e+00> : vector<16xf32>
    %195 = vector.multi_reduction <add>, %194, %cst_49 [1] : vector<16x32xf32> to vector<16xf32>
    %196 = vector.shape_cast %195 : vector<16xf32> to vector<16x1xf32>
    %cst_50 = arith.constant 3.200000e+01 : f32
    %197 = vector.broadcast %cst_50 : f32 to vector<16x1xf32>
    %198 = arith.divf %196, %197 : vector<16x1xf32>
    %199 = arith.mulf %194, %194 : vector<16x32xf32>
    %cst_51 = arith.constant dense<0.000000e+00> : vector<16xf32>
    %200 = vector.multi_reduction <add>, %199, %cst_51 [1] : vector<16x32xf32> to vector<16xf32>
    %201 = vector.shape_cast %200 : vector<16xf32> to vector<16x1xf32>
    %cst_52 = arith.constant 3.200000e+01 : f32
    %202 = vector.broadcast %cst_52 : f32 to vector<16x1xf32>
    %203 = arith.divf %201, %202 : vector<16x1xf32>
    %204 = arith.mulf %198, %198 : vector<16x1xf32>
    %205 = arith.subf %203, %204 : vector<16x1xf32>
    %206 = vector.broadcast %198 : vector<16x1xf32> to vector<16x32xf32>
    %207 = arith.subf %194, %206 : vector<16x32xf32>
    %cst_53 = arith.constant 9.99999974E-6 : f32
    %208 = vector.broadcast %cst_53 : f32 to vector<16x1xf32>
    %209 = arith.addf %205, %208 : vector<16x1xf32>
    %210 = math.rsqrt %209 : vector<16x1xf32>
    %211 = vector.broadcast %210 : vector<16x1xf32> to vector<16x32xf32>
    %212 = arith.mulf %207, %211 : vector<16x32xf32>
    %213 = vector.broadcast %137 : vector<1x32xf32> to vector<16x32xf32>
    %214 = arith.mulf %212, %213 : vector<16x32xf32>
    %215 = vector.broadcast %138 : vector<1x32xf32> to vector<16x32xf32>
    %216 = arith.addf %214, %215 : vector<16x32xf32>
    %217 = arith.truncf %216 : vector<16x32xf32> to vector<16x32xbf16>
    %cst_54 = arith.constant dense<0.000000e+00> : vector<16x128xf32>
    %218 = tpu.matmul %217, %129, %cst_54 {dimension_numbers = #tpu.dot_dimension_numbers<[1], [0], [0], [1], [0, 0, 1, 1], [], []>} : vector<16x32xbf16>, vector<32x128xbf16>, vector<16x128xf32> -> vector<16x128xf32>
    %219 = vector.broadcast %139 : vector<1x128xf32> to vector<16x128xf32>
    %220 = arith.addf %218, %219 : vector<16x128xf32>
    %cst_55 = arith.constant 0.000000e+00 : f32
    %221 = vector.broadcast %cst_55 : f32 to vector<16x128xf32>
    %222 = arith.maximumf %220, %221 : vector<16x128xf32>
    %223 = arith.truncf %222 : vector<16x128xf32> to vector<16x128xbf16>
    %cst_56 = arith.constant dense<0.000000e+00> : vector<16x32xf32>
    %224 = tpu.matmul %223, %130, %cst_56 {dimension_numbers = #tpu.dot_dimension_numbers<[1], [1], [0], [0], [0, 0, 1, 0], [], []>} : vector<16x128xbf16>, vector<32x128xbf16>, vector<16x32xf32> -> vector<16x32xf32>
    %225 = vector.broadcast %140 : vector<1x32xf32> to vector<16x32xf32>
    %226 = arith.addf %224, %225 : vector<16x32xf32>
    %227 = arith.addf %194, %216 : vector<16x32xf32>
    %228 = arith.addf %227, %226 : vector<16x32xf32>
    %cst_57 = arith.constant dense<0.000000e+00> : vector<8x32xf32>
    %229 = tpu.matmul %20, %228, %cst_57 {dimension_numbers = #tpu.dot_dimension_numbers<[1], [0], [0], [1], [0, 0, 1, 1], [], []>} : vector<8x16xf32>, vector<16x32xf32>, vector<8x32xf32> -> vector<8x32xf32>
    %c0_58 = arith.constant 0 : index
    %c0_59 = arith.constant 0 : index
    %230 = vector.load %arg3[%c0_58, %c0_59] : memref<8x32xf32, #tpu.memory_space<vmem>>, vector<8x32xf32>
    tpu.vector_store %arg3[%c0_58, %c0_59], %229 {strides = array<i32>} : memref<8x32xf32, #tpu.memory_space<vmem>>, vector<8x32xf32>,
    return
  }
}

</mosaic_0001>

<llo_original>
// kernel: bert_feature_extraction.1
$region0: #{bert_feature_extraction.1}
  #allocation0 [shape = 'u32[]', space=smem, size = 0x4, offset = 0x4, fixed_abs, tag = 'smem constant byte address 0x4 - core index']
  #allocation1 [shape = 'u32[144,128]{1,0:T(1,128)}', space=vmem, size = 0x12000, scoped, tag = 'internal scratch']
  %s0 = inlined_call_operand.hbm [shape: f32[16,32], index: 0, kind: input, shape index: {}]
  %s1 = inlined_call_operand.hbm [shape: bf16[2,32,512], index: 1, kind: input, shape index: {}]
  %s2 = inlined_call_operand.hbm [shape: f32[2,8,128], index: 2, kind: input, shape index: {}]
  %s3 = inlined_call_operand.hbm [shape: f32[8,32], index: 3, kind: output, shape index: {}]
  %s4 = sld [smem:[#allocation0]]
  $region34: #{bert_feature_extraction.1} parent=0
    _
  %s6 = ssub.s32 1, %s4
  %s7 = scalar_select 0, %s6, %s4
  $region1: #{bert_feature_extraction.1} parent=0
    #allocation2 [shape = 'u8[8192]{0}', space=vmem, size = 0x2000, scoped, tag = 'input window, operand 0, single buffered']
    #allocation3 [shape = 's32[1]{0}', space=sflag, size = 0x4, scoped, tag = 'scoped memory for bert_feature_extraction.1']
    #allocation4 [shape = 's32[1]{0}', space=sflag, size = 0x4, scoped, tag = 'scoped memory for bert_feature_extraction.1']
    #allocation5 [shape = 'u8[65536]{0}', space=vmem, size = 0x10000, scoped, tag = 'input window, operand 1, single buffered']
    #allocation6 [shape = 's32[1]{0}', space=sflag, size = 0x4, scoped, tag = 'scoped memory for bert_feature_extraction.1']
    #allocation7 [shape = 'u8[8192]{0}', space=vmem, size = 0x2000, scoped, tag = 'input window, operand 2, single buffered']
    #allocation8 [shape = 'u8[4096]{0}', space=vmem, size = 0x1000, scoped, tag = 'output window, operand 0, single buffered']
    %8 = vsyncpa [#allocation3], 0
    %9 = vsyncpa [#allocation6], 0
    %10 = vsyncpa [#allocation4], 0
    // Predicated region
    $region2: #{bert_feature_extraction.1} parent=1 // pred_check
      _
    $region3: #{bert_feature_extraction.1} parent=1 // pred_check_branch
      %12 = sbr.rel (0) target = $region5
    $region4: #{bert_feature_extraction.1} parent=1 // pred_region
      %s14 = ssub.s32 256, 256
      %15 = vsyncadd [#allocation3], %s14
      %s16 = sshll.u32 [#allocation2], 4
      %s17 = int_to_ptr.vmem [resolvable:$true] %s16
      %22 = dma.hbm_to_vmem [thread:$0]  %s0, 256, %s17, [#allocation3], 128, 128, 8
    $region5: #{bert_feature_extraction.1} parent=1 // pred_fallthru
      _
    // Predicated region
    $region6: #{bert_feature_extraction.1} parent=1 // pred_check
      _
    $region7: #{bert_feature_extraction.1} parent=1 // pred_check_branch
      %24 = sbr.rel (0) target = $region9
    $region8: #{bert_feature_extraction.1} parent=1 // pred_region
      %s26 = ssub.s32 2048, 2048
      %27 = vsyncadd [#allocation6], %s26
      %s28 = sshll.u32 [#allocation5], 4
      %s29 = int_to_ptr.vmem [resolvable:$true] %s28
      %34 = dma.hbm_to_vmem [thread:$0]  %s1, 2048, %s29, [#allocation6], 256, 256, 16
    $region9: #{bert_feature_extraction.1} parent=1 // pred_fallthru
      _
    // Predicated region
    $region10: #{bert_feature_extraction.1} parent=1 // pred_check
      _
    $region11: #{bert_feature_extraction.1} parent=1 // pred_check_branch
      %36 = sbr.rel (0) target = $region13
    $region12: #{bert_feature_extraction.1} parent=1 // pred_region
      %s38 = ssub.s32 256, 256
      %39 = vsyncadd [#allocation6], %s38
      %s40 = sshll.u32 [#allocation7], 4
      %s41 = int_to_ptr.vmem [resolvable:$true] %s40
      %46 = dma.hbm_to_vmem [thread:$0]  %s2, 256, %s41, [#allocation6], 128, 128, 8
    $region13: #{bert_feature_extraction.1} parent=1 // pred_fallthru
      _
    // Predicated region
    $region14: #{bert_feature_extraction.1} parent=1 // pred_check
      _
    $region15: #{bert_feature_extraction.1} parent=1 // pred_check_branch
      %48 = sbr.rel (0) target = $region17
    $region16: #{bert_feature_extraction.1} parent=1 // pred_region
      %49 = dma.done [#allocation3], 256
    $region17: #{bert_feature_extraction.1} parent=1 // pred_fallthru
      _
    // Predicated region
    $region18: #{bert_feature_extraction.1} parent=1 // pred_check
      _
    $region19: #{bert_feature_extraction.1} parent=1 // pred_check_branch
      %51 = sbr.rel (0) target = $region21
    $region20: #{bert_feature_extraction.1} parent=1 // pred_region
      %52 = dma.done [#allocation6], 2048
    $region21: #{bert_feature_extraction.1} parent=1 // pred_fallthru
      _
    // Predicated region
    $region22: #{bert_feature_extraction.1} parent=1 // pred_check
      _
    $region23: #{bert_feature_extraction.1} parent=1 // pred_check_branch
      %54 = sbr.rel (0) target = $region25
    $region24: #{bert_feature_extraction.1} parent=1 // pred_region
      %55 = dma.done [#allocation6], 256
    $region25: #{bert_feature_extraction.1} parent=1 // pred_fallthru
      _
    %v57 = vld [vmem:[#allocation2] sm:$0xff]
    %v58 = vld [vmem:[#allocation2 + $0x8] sm:$0xff]
    %v59 = vlaneseq
    %v60 = vshrl.u32 %v59, 7
    %v61 = vadd.s32 %v60, 8
    %v62 = vcvt.s32.f32 %v60
    %v63 = vcvt.s32.f32 %v61
    %v64 = vlaneseq
    %v65 = vand.u32 %v64, 127
    %v66 = vcvt.s32.f32 %v65
    %v67 = vsub.f32 %v62, %v66
    %v68 = vsub.f32 %v63, %v66
    %v69 = vrcp.pop 2.0
    %v70 = vmul.f32 %v67, %v69
    %v71 = vmul.f32 %v68, %v69
    %v72 = vfloor.f32 %v70
    %v73 = vfloor.f32 %v71
    %vm74 = vcmp.eq.f32.partialorder %v70, %v72
    %vm75 = vcmp.eq.f32.partialorder %v71, %v73
    %v76 = vmul.f32 %v66, %v69
    %v77 = vfloor.f32 %v76
    %vm78 = vcmp.eq.f32.partialorder %v77, %v62
    %v79 = vsel %vm78, 0.5, 0.0
    %v80 = vld [vmem:[#allocation5] sm:$0xff]
    %v81 = vld [vmem:[#allocation5 + $0x8] sm:$0xff]
    %v82 = vld [vmem:[#allocation5 + $0x10] sm:$0xff]
    %v83 = vld [vmem:[#allocation5 + $0x18] sm:$0xff]
    %v84 = vld [vmem:[#allocation5 + $0x20] sm:$0xff]
    %v85 = vld [vmem:[#allocation5 + $0x28] sm:$0xff]
    %v86 = vld [vmem:[#allocation5 + $0x30] sm:$0xff]
    %v87 = vld [vmem:[#allocation5 + $0x38] sm:$0xff]
    %v88 = vld [vmem:[#allocation7] sm:$0xff]
    %vm89 = vcmask 261120
    %v90 = vsel %vm89, %v57, 0.0
    %91 = vadd.xlane.f32.xlu0 %v90
    %v92 = vpop.xlane.xlu0 %91
    %v93 = vsel %vm89, %v58, 0.0
    %94 = vadd.xlane.f32.xlu0 %v93
    %v95 = vpop.xlane.xlu0 %94
    %v96 = vrcp.pop 32.0
    %v97 = vmul.f32 %v92, %v96
    %v98 = vmul.f32 %v95, %v96
    %v99 = vmul.f32 %v57, %v57
    %v100 = vmul.f32 %v58, %v58
    %v101 = vsel %vm89, %v99, 0.0
    %102 = vadd.xlane.f32.xlu0 %v101
    %v103 = vpop.xlane.xlu0 %102
    %v104 = vsel %vm89, %v100, 0.0
    %105 = vadd.xlane.f32.xlu0 %v104
    %v106 = vpop.xlane.xlu0 %105
    %v107 = vmul.f32 %v103, %v96
    %v108 = vmul.f32 %v106, %v96
    %v109 = vmul.f32 %v97, %v97
    %v110 = vmul.f32 %v98, %v98
    %v111 = vsub.f32 %v107, %v109
    %v112 = vsub.f32 %v108, %v110
    %v113 = vsub.f32 %v57, %v97
    %v114 = vsub.f32 %v58, %v98
    %v115 = vadd.f32 %v111, 1e-05
    %v116 = vadd.f32 %v112, 1e-05
    %v117 = vrsqrt.pop %v115
    %v118 = vrsqrt.pop %v116
    %v119 = vmul.f32 %v113, %v117
    %v120 = vmul.f32 %v114, %v118
    %v121 = vlaneseq
    %v122 = vshrl.u32 %v121, 7
    %v123 = vsub.s32 0, %v122
    %v124 = vrot.slane %v88, %v123
    %v125 = vmul.f32 %v119, %v124
    %v126 = vmul.f32 %v120, %v124
    %v127 = vlaneseq
    %v128 = vshrl.u32 %v127, 7
    %v129 = vsub.s32 1, %v128
    %v130 = vrot.slane %v88, %v129
    %v131 = vadd.f32 %v125, %v130
    %v132 = vadd.f32 %v126, %v130
    %v133 = vpack.c.bf16 %v132, %v131
    %v134 = vlaneseq
    %v135 = vshrl.u32 %v134, 7
    %v136 = vsub.s32 2, %v135
    %v137 = vrot.slane %v88, %v136
    %v142 = vunpack.c.l.b16 %v81
    %v143 = vunpack.c.l.b16 %v83
    %v144 = vunpack.c.l.b16 %v85
    %v145 = vunpack.c.l.b16 %v87
    %v146 = vpack.c.b16 %v143, %v142
    %v147 = vpack.c.b16 %v145, %v144
    %v151 = vsel %vm89, %v133, 0
    %153 = vmatprep.subr.bf16.mxu0 0
    %154 = vmatpush1.bf16.msra.mxu0 0
    %155 = vmatprep.subr.bf16.mxu0 0
    %156 = vmatpush1.bf16.msra.mxu0 0
    %157 = vmatprep.subr.bf16.mxu0 0
    %158 = vmatpush1.bf16.msra.mxu0 0
    %159 = vmatprep.subr.bf16.mxu0 0
    %160 = vmatpush1.bf16.msra.mxu0 0
    %161 = vmatprep.subr.bf16.mxu0 0
    %162 = vmatpush1.bf16.msra.mxu0 0
    %163 = vmatprep.subr.bf16.mxu0 0
    %164 = vmatpush1.bf16.msra.mxu0 0
    %165 = vmatprep.subr.bf16.mxu0 0
    %166 = vmatpush1.bf16.msra.mxu0 %v147
    %167 = vmatprep.subr.bf16.mxu0 0
    %168 = vmatpush1.bf16.msra.mxu0 %v146
    %169 = vmatprep.subr.bf16.mxu0 0
    %170 = vmatpush2.bf16.msra.mxu0 0
    %171 = vmatprep.subr.bf16.mxu0 0
    %172 = vmatpush2.bf16.msra.mxu0 0
    %173 = vmatprep.subr.bf16.mxu0 0
    %174 = vmatpush2.bf16.msra.mxu0 0
    %175 = vmatprep.subr.bf16.mxu0 0
    %176 = vmatpush2.bf16.msra.mxu0 0
    %177 = vmatprep.subr.bf16.mxu0 0
    %178 = vmatpush2.bf16.msra.mxu0 0
    %179 = vmatprep.subr.bf16.mxu0 0
    %180 = vmatpush2.bf16.msra.mxu0 0
    %181 = vmatprep.subr.bf16.mxu0 0
    %182 = vmatpush2.bf16.msra.mxu0 0
    %183 = vmatprep.subr.bf16.mxu0 0
    %184 = vmatpush2.bf16.msra.mxu0 0
    %185 = vmatprep.mubr.bf16.mxu0 0
    %186 = vmatmul.mubr.bf16.gmra.mxu0 %v151
    %v187 = vpop.f32.mrf.mxu0
    %v188 = vadd.f32 %v137, %v187
    %v189 = vpop.f32.mrf.mxu0
    %v190 = vpop.f32.mrf.mxu0
    %v191 = vadd.f32 %v137, %v190
    %v192 = vpop.f32.mrf.mxu0
    %193 = vdwg.mxu0
    %v194 = vpack.c.bf16 %v191, %v188
    %196 = vrot.lane.b32.xlu0 %v194, 96
    %v197 = vpop.permute.xlu0 %196
    %v199 = vsel %vm89, %v194, 0
    %v202 = vsel %vm89, %v197, 0
    %204 = vmatprep.subr.bf16.mxu0 0
    %205 = vmatpush1.bf16.xpose.msra.mxu0 0
    %206 = vmatprep.subr.bf16.mxu0 0
    %207 = vmatpush1.bf16.xpose.msra.mxu0 0
    %208 = vmatprep.subr.bf16.mxu0 0
    %209 = vmatpush1.bf16.xpose.msra.mxu0 0
    %210 = vmatprep.subr.bf16.mxu0 0
    %211 = vmatpush1.bf16.xpose.msra.mxu0 0
    %212 = vmatprep.subr.bf16.mxu0 0
    %213 = vmatpush1.bf16.xpose.msra.mxu0 0
    %214 = vmatprep.subr.bf16.mxu0 0
    %215 = vmatpush1.bf16.xpose.msra.mxu0 0
    %216 = vmatprep.subr.bf16.mxu0 0
    %217 = vmatpush1.bf16.xpose.msra.mxu0 0
    %218 = vmatprep.subr.bf16.mxu0 0
    %219 = vmatpush1.bf16.xpose.msra.mxu0 %v202
    %220 = vmatprep.subr.bf16.mxu0 0
    %221 = vmatpush2.bf16.xpose.msra.mxu0 0
    %222 = vmatprep.subr.bf16.mxu0 0
    %223 = vmatpush2.bf16.xpose.msra.mxu0 0
    %224 = vmatprep.subr.bf16.mxu0 0
    %225 = vmatpush2.bf16.xpose.msra.mxu0 0
    %226 = vmatprep.subr.bf16.mxu0 0
    %227 = vmatpush2.bf16.xpose.msra.mxu0 0
    %228 = vmatprep.subr.bf16.mxu0 0
    %229 = vmatpush2.bf16.xpose.msra.mxu0 0
    %230 = vmatprep.subr.bf16.mxu0 0
    %231 = vmatpush2.bf16.xpose.msra.mxu0 0
    %232 = vmatprep.subr.bf16.mxu0 0
    %233 = vmatpush2.bf16.xpose.msra.mxu0 0
    %234 = vmatprep.subr.bf16.mxu0 0
    %235 = vmatpush2.bf16.xpose.msra.mxu0 0
    %236 = vmatprep.mubr.bf16.mxu0 0
    %237 = vmatmul.mubr.bf16.gmra.mxu0 %v199
    %v238 = vpop.f32.mrf.mxu0
    %v239 = vadd.f32 0.0, %v238
    %v240 = vpop.f32.mrf.mxu0
    %v241 = vpop.f32.mrf.mxu0
    %v242 = vadd.f32 0.0, %v241
    %v243 = vpop.f32.mrf.mxu0
    %244 = vdwg.mxu0
    %v245 = vmul.f32 %v239, 0.17677669
    %v246 = vmul.f32 %v242, 0.17677669
    %v247 = vsel %vm74, %v245, -1e+30
    %v248 = vsel %vm75, %v246, -1e+30
    %vm249 = vcmask 130048
    %v250 = vsel %vm249, %v247, -inf
    %251 = vmax.xlane.f32.xlu0 %v250
    %v252 = vpop.xlane.xlu0 %251
    %v253 = vsel %vm249, %v248, -inf
    %254 = vmax.xlane.f32.xlu0 %v253
    %v255 = vpop.xlane.xlu0 %254
    %v256 = vsub.f32 %v247, %v252
    %v257 = vsub.f32 %v248, %v255
    %v258 = vmul.f32 %v256, 1.442695
    %v259 = vpow.pop %v258
    %v260 = vmul.f32 %v257, 1.442695
    %v261 = vpow.pop %v260
    %v262 = vsel %vm249, %v259, 0.0
    %263 = vadd.xlane.f32.xlu0 %v262
    %v264 = vpop.xlane.xlu0 %263
    %v265 = vsel %vm249, %v261, 0.0
    %266 = vadd.xlane.f32.xlu0 %v265
    %v267 = vpop.xlane.xlu0 %266
    %v268 = vrcp.pop %v264
    %v269 = vrcp.pop %v267
    %v270 = vmul.f32 %v259, %v268
    %v271 = vmul.f32 %v261, %v269
    %v272 = vpack.c.bf16 %v271, %v270
    %273 = vrot.lane.b32.xlu0 %v194, 64
    %v274 = vpop.permute.xlu0 %273
    %v277 = vsel %vm249, %v272, 0
    %279 = vmatprep.subr.bf16.mxu0 0
    %280 = vmatpush1.bf16.msra.mxu0 0
    %281 = vmatprep.subr.bf16.mxu0 0
    %282 = vmatpush1.bf16.msra.mxu0 0
    %283 = vmatprep.subr.bf16.mxu0 0
    %284 = vmatpush1.bf16.msra.mxu0 0
    %285 = vmatprep.subr.bf16.mxu0 0
    %286 = vmatpush1.bf16.msra.mxu0 0
    %287 = vmatprep.subr.bf16.mxu0 0
    %288 = vmatpush1.bf16.msra.mxu0 0
    %289 = vmatprep.subr.bf16.mxu0 0
    %290 = vmatpush1.bf16.msra.mxu0 0
    %291 = vmatprep.subr.bf16.mxu0 0
    %292 = vmatpush1.bf16.msra.mxu0 0
    %293 = vmatprep.subr.bf16.mxu0 0
    %294 = vmatpush1.bf16.msra.mxu0 %v274
    %295 = vmatprep.subr.bf16.mxu0 0
    %296 = vmatpush2.bf16.msra.mxu0 0
    %297 = vmatprep.subr.bf16.mxu0 0
    %298 = vmatpush2.bf16.msra.mxu0 0
    %299 = vmatprep.subr.bf16.mxu0 0
    %300 = vmatpush2.bf16.msra.mxu0 0
    %301 = vmatprep.subr.bf16.mxu0 0
    %302 = vmatpush2.bf16.msra.mxu0 0
    %303 = vmatprep.subr.bf16.mxu0 0
    %304 = vmatpush2.bf16.msra.mxu0 0
    %305 = vmatprep.subr.bf16.mxu0 0
    %306 = vmatpush2.bf16.msra.mxu0 0
    %307 = vmatprep.subr.bf16.mxu0 0
    %308 = vmatpush2.bf16.msra.mxu0 0
    %309 = vmatprep.subr.bf16.mxu0 0
    %310 = vmatpush2.bf16.msra.mxu0 0
    %311 = vmatprep.mubr.bf16.mxu0 0
    %312 = vmatmul.mubr.bf16.gmra.mxu0 %v277
    %v313 = vpop.f32.mrf.mxu0
    %v314 = vadd.f32 0.0, %v313
    %v315 = vpop.f32.mrf.mxu0
    %v316 = vpop.f32.mrf.mxu0
    %v317 = vadd.f32 0.0, %v316
    %v318 = vpop.f32.mrf.mxu0
    %319 = vdwg.mxu0
    %v320 = vpack.c.bf16 %v317, %v314
    %v321 = vlaneseq
    %v322 = vshrl.u32 %v321, 7
    %v323 = vsub.s32 3, %v322
    %v324 = vrot.slane %v88, %v323
    %v325 = vunpack.c.h.b16 %v81
    %v326 = vunpack.c.h.b16 %v83
    %v327 = vunpack.c.h.b16 %v85
    %v328 = vunpack.c.h.b16 %v87
    %v329 = vpack.c.b16 %v326, %v325
    %v330 = vpack.c.b16 %v328, %v327
    %v334 = vsel %vm89, %v320, 0
    %336 = vmatprep.subr.bf16.mxu0 0
    %337 = vmatpush1.bf16.msra.mxu0 0
    %338 = vmatprep.subr.bf16.mxu0 0
    %339 = vmatpush1.bf16.msra.mxu0 0
    %340 = vmatprep.subr.bf16.mxu0 0
    %341 = vmatpush1.bf16.msra.mxu0 0
    %342 = vmatprep.subr.bf16.mxu0 0
    %343 = vmatpush1.bf16.msra.mxu0 0
    %344 = vmatprep.subr.bf16.mxu0 0
    %345 = vmatpush1.bf16.msra.mxu0 0
    %346 = vmatprep.subr.bf16.mxu0 0
    %347 = vmatpush1.bf16.msra.mxu0 0
    %348 = vmatprep.subr.bf16.mxu0 0
    %349 = vmatpush1.bf16.msra.mxu0 %v330
    %350 = vmatprep.subr.bf16.mxu0 0
    %351 = vmatpush1.bf16.msra.mxu0 %v329
    %352 = vmatprep.subr.bf16.mxu0 0
    %353 = vmatpush2.bf16.msra.mxu0 0
    %354 = vmatprep.subr.bf16.mxu0 0
    %355 = vmatpush2.bf16.msra.mxu0 0
    %356 = vmatprep.subr.bf16.mxu0 0
    %357 = vmatpush2.bf16.msra.mxu0 0
    %358 = vmatprep.subr.bf16.mxu0 0
    %359 = vmatpush2.bf16.msra.mxu0 0
    %360 = vmatprep.subr.bf16.mxu0 0
    %361 = vmatpush2.bf16.msra.mxu0 0
    %362 = vmatprep.subr.bf16.mxu0 0
    %363 = vmatpush2.bf16.msra.mxu0 0
    %364 = vmatprep.subr.bf16.mxu0 0
    %365 = vmatpush2.bf16.msra.mxu0 0
    %366 = vmatprep.subr.bf16.mxu0 0
    %367 = vmatpush2.bf16.msra.mxu0 0
    %368 = vmatprep.mubr.bf16.mxu0 0
    %369 = vmatmul.mubr.bf16.gmra.mxu0 %v334
    %v370 = vpop.f32.mrf.mxu0
    %v371 = vadd.f32 %v324, %v370
    %v372 = vpop.f32.mrf.mxu0
    %v373 = vpop.f32.mrf.mxu0
    %v374 = vadd.f32 %v324, %v373
    %v375 = vpop.f32.mrf.mxu0
    %376 = vdwg.mxu0
    %v377 = vadd.f32 %v371, %v57
    %v378 = vadd.f32 %v374, %v58
    %v379 = vsel %vm89, %v377, 0.0
    %380 = vadd.xlane.f32.xlu0 %v379
    %v381 = vpop.xlane.xlu0 %380
    %v382 = vsel %vm89, %v378, 0.0
    %383 = vadd.xlane.f32.xlu0 %v382
    %v384 = vpop.xlane.xlu0 %383
    %v385 = vmul.f32 %v381, %v96
    %v386 = vmul.f32 %v384, %v96
    %v387 = vmul.f32 %v377, %v377
    %v388 = vmul.f32 %v378, %v378
    %v389 = vsel %vm89, %v387, 0.0
    %390 = vadd.xlane.f32.xlu0 %v389
    %v391 = vpop.xlane.xlu0 %390
    %v392 = vsel %vm89, %v388, 0.0
    %393 = vadd.xlane.f32.xlu0 %v392
    %v394 = vpop.xlane.xlu0 %393
    %v395 = vmul.f32 %v391, %v96
    %v396 = vmul.f32 %v394, %v96
    %v397 = vmul.f32 %v385, %v385
    %v398 = vmul.f32 %v386, %v386
    %v399 = vsub.f32 %v395, %v397
    %v400 = vsub.f32 %v396, %v398
    %v401 = vsub.f32 %v377, %v385
    %v402 = vsub.f32 %v378, %v386
    %v403 = vadd.f32 %v399, 1e-05
    %v404 = vadd.f32 %v400, 1e-05
    %v405 = vrsqrt.pop %v403
    %v406 = vrsqrt.pop %v404
    %v407 = vmul.f32 %v401, %v405
    %v408 = vmul.f32 %v402, %v406
    %v409 = vlaneseq
    %v410 = vshrl.u32 %v409, 7
    %v411 = vsub.s32 4, %v410
    %v412 = vrot.slane %v88, %v411
    %v413 = vmul.f32 %v407, %v412
    %v414 = vmul.f32 %v408, %v412
    %v415 = vlaneseq
    %v416 = vshrl.u32 %v415, 7
    %v417 = vsub.s32 5, %v416
    %v418 = vrot.slane %v88, %v417
    %v419 = vadd.f32 %v413, %v418
    %v420 = vadd.f32 %v414, %v418
    %v421 = vpack.c.bf16 %v420, %v419
    %v422 = vlaneseq
    %v423 = vshrl.u32 %v422, 7
    %v424 = vsub.s32 6, %v423
    %v425 = vrot.slane %v88, %v424
    %v430 = vunpack.c.l.b16 %v80
    %v431 = vunpack.c.l.b16 %v82
    %v432 = vunpack.c.l.b16 %v84
    %v433 = vunpack.c.l.b16 %v86
    %v434 = vpack.c.b16 %v431, %v430
    %v435 = vpack.c.b16 %v433, %v432
    %v439 = vsel %vm89, %v421, 0
    %441 = vmatprep.subr.bf16.mxu0 0
    %442 = vmatpush1.bf16.msra.mxu0 0
    %443 = vmatprep.subr.bf16.mxu0 0
    %444 = vmatpush1.bf16.msra.mxu0 0
    %445 = vmatprep.subr.bf16.mxu0 0
    %446 = vmatpush1.bf16.msra.mxu0 0
    %447 = vmatprep.subr.bf16.mxu0 0
    %448 = vmatpush1.bf16.msra.mxu0 0
    %449 = vmatprep.subr.bf16.mxu0 0
    %450 = vmatpush1.bf16.msra.mxu0 0
    %451 = vmatprep.subr.bf16.mxu0 0
    %452 = vmatpush1.bf16.msra.mxu0 0
    %453 = vmatprep.subr.bf16.mxu0 0
    %454 = vmatpush1.bf16.msra.mxu0 %v435
    %455 = vmatprep.subr.bf16.mxu0 0
    %456 = vmatpush1.bf16.msra.mxu0 %v434
    %457 = vmatprep.subr.bf16.mxu0 0
    %458 = vmatpush2.bf16.msra.mxu0 0
    %459 = vmatprep.subr.bf16.mxu0 0
    %460 = vmatpush2.bf16.msra.mxu0 0
    %461 = vmatprep.subr.bf16.mxu0 0
    %462 = vmatpush2.bf16.msra.mxu0 0
    %463 = vmatprep.subr.bf16.mxu0 0
    %464 = vmatpush2.bf16.msra.mxu0 0
    %465 = vmatprep.subr.bf16.mxu0 0
    %466 = vmatpush2.bf16.msra.mxu0 0
    %467 = vmatprep.subr.bf16.mxu0 0
    %468 = vmatpush2.bf16.msra.mxu0 0
    %469 = vmatprep.subr.bf16.mxu0 0
    %470 = vmatpush2.bf16.msra.mxu0 0
    %471 = vmatprep.subr.bf16.mxu0 0
    %472 = vmatpush2.bf16.msra.mxu0 0
    %473 = vmatprep.mubr.bf16.mxu0 0
    %474 = vmatmul.mubr.bf16.gmra.mxu0 %v439
    %v475 = vpop.f32.mrf.mxu0
    %v476 = vadd.f32 %v425, %v475
    %v477 = vpop.f32.mrf.mxu0
    %v478 = vpop.f32.mrf.mxu0
    %v479 = vadd.f32 %v425, %v478
    %v480 = vpop.f32.mrf.mxu0
    %481 = vdwg.mxu0
    %v482 = vmax.f32 %v476, 0.0
    %v483 = vmax.f32 %v479, 0.0
    %v484 = vpack.c.bf16 %v483, %v482
    %v485 = vlaneseq
    %v486 = vshrl.u32 %v485, 7
    %v487 = vsub.s32 7, %v486
    %v488 = vrot.slane %v88, %v487
    %v489 = vunpack.c.h.b16 %v80
    %v490 = vunpack.c.h.b16 %v82
    %v491 = vunpack.c.h.b16 %v84
    %v492 = vunpack.c.h.b16 %v86
    %v493 = vpack.c.b16 %v490, %v489
    %v494 = vpack.c.b16 %v492, %v491
    %497 = vmatprep.subr.bf16.mxu0 0
    %498 = vmatpush1.bf16.xpose.msra.mxu0 0
    %499 = vmatprep.subr.bf16.mxu0 0
    %500 = vmatpush1.bf16.xpose.msra.mxu0 0
    %501 = vmatprep.subr.bf16.mxu0 0
    %502 = vmatpush1.bf16.xpose.msra.mxu0 0
    %503 = vmatprep.subr.bf16.mxu0 0
    %504 = vmatpush1.bf16.xpose.msra.mxu0 0
    %505 = vmatprep.subr.bf16.mxu0 0
    %506 = vmatpush1.bf16.xpose.msra.mxu0 0
    %507 = vmatprep.subr.bf16.mxu0 0
    %508 = vmatpush1.bf16.xpose.msra.mxu0 0
    %509 = vmatprep.subr.bf16.mxu0 0
    %510 = vmatpush1.bf16.xpose.msra.mxu0 %v494
    %511 = vmatprep.subr.bf16.mxu0 0
    %512 = vmatpush1.bf16.xpose.msra.mxu0 %v493
    %513 = vmatprep.subr.bf16.mxu0 0
    %514 = vmatpush2.bf16.xpose.msra.mxu0 0
    %515 = vmatprep.subr.bf16.mxu0 0
    %516 = vmatpush2.bf16.xpose.msra.mxu0 0
    %517 = vmatprep.subr.bf16.mxu0 0
    %518 = vmatpush2.bf16.xpose.msra.mxu0 0
    %519 = vmatprep.subr.bf16.mxu0 0
    %520 = vmatpush2.bf16.xpose.msra.mxu0 0
    %521 = vmatprep.subr.bf16.mxu0 0
    %522 = vmatpush2.bf16.xpose.msra.mxu0 0
    %523 = vmatprep.subr.bf16.mxu0 0
    %524 = vmatpush2.bf16.xpose.msra.mxu0 0
    %525 = vmatprep.subr.bf16.mxu0 0
    %526 = vmatpush2.bf16.xpose.msra.mxu0 0
    %527 = vmatprep.subr.bf16.mxu0 0
    %528 = vmatpush2.bf16.xpose.msra.mxu0 0
    %529 = vmatprep.mubr.bf16.mxu0 0
    %530 = vmatmul.mubr.bf16.gmra.mxu0 %v484
    %v531 = vpop.f32.mrf.mxu0
    %v532 = vadd.f32 %v488, %v531
    %v533 = vpop.f32.mrf.mxu0
    %v534 = vpop.f32.mrf.mxu0
    %v535 = vadd.f32 %v488, %v534
    %v536 = vpop.f32.mrf.mxu0
    %537 = vdwg.mxu0
    %v538 = vadd.f32 %v377, %v419
    %v539 = vadd.f32 %v378, %v420
    %v540 = vadd.f32 %v538, %v532
    %v541 = vadd.f32 %v539, %v535
    %s542 = scalar_lea.vmem [#allocation5], 64
    %v543 = vld [vmem:[%s542] sm:$0xff]
    %v544 = vld [vmem:[%s542 + $0x8] sm:$0xff]
    %v545 = vld [vmem:[%s542 + $0x10] sm:$0xff]
    %v546 = vld [vmem:[%s542 + $0x18] sm:$0xff]
    %v547 = vld [vmem:[%s542 + $0x20] sm:$0xff]
    %v548 = vld [vmem:[%s542 + $0x28] sm:$0xff]
    %v549 = vld [vmem:[%s542 + $0x30] sm:$0xff]
    %v550 = vld [vmem:[%s542 + $0x38] sm:$0xff]
    %s551 = scalar_lea.vmem [#allocation7], 8
    %v552 = vld [vmem:[%s551] sm:$0xff]
    %v553 = vsel %vm89, %v540, 0.0
    %554 = vadd.xlane.f32.xlu0 %v553
    %v555 = vpop.xlane.xlu0 %554
    %v556 = vsel %vm89, %v541, 0.0
    %557 = vadd.xlane.f32.xlu0 %v556
    %v558 = vpop.xlane.xlu0 %557
    %v559 = vmul.f32 %v555, %v96
    %v560 = vmul.f32 %v558, %v96
    %v561 = vmul.f32 %v540, %v540
    %v562 = vmul.f32 %v541, %v541
    %v563 = vsel %vm89, %v561, 0.0
    %564 = vadd.xlane.f32.xlu0 %v563
    %v565 = vpop.xlane.xlu0 %564
    %v566 = vsel %vm89, %v562, 0.0
    %567 = vadd.xlane.f32.xlu0 %v566
    %v568 = vpop.xlane.xlu0 %567
    %v569 = vmul.f32 %v565, %v96
    %v570 = vmul.f32 %v568, %v96
    %v571 = vmul.f32 %v559, %v559
    %v572 = vmul.f32 %v560, %v560
    %v573 = vsub.f32 %v569, %v571
    %v574 = vsub.f32 %v570, %v572
    %v575 = vsub.f32 %v540, %v559
    %v576 = vsub.f32 %v541, %v560
    %v577 = vadd.f32 %v573, 1e-05
    %v578 = vadd.f32 %v574, 1e-05
    %v579 = vrsqrt.pop %v577
    %v580 = vrsqrt.pop %v578
    %v581 = vmul.f32 %v575, %v579
    %v582 = vmul.f32 %v576, %v580
    %v583 = vlaneseq
    %v584 = vshrl.u32 %v583, 7
    %v585 = vsub.s32 0, %v584
    %v586 = vrot.slane %v552, %v585
    %v587 = vmul.f32 %v581, %v586
    %v588 = vmul.f32 %v582, %v586
    %v589 = vlaneseq
    %v590 = vshrl.u32 %v589, 7
    %v591 = vsub.s32 1, %v590
    %v592 = vrot.slane %v552, %v591
    %v593 = vadd.f32 %v587, %v592
    %v594 = vadd.f32 %v588, %v592
    %v595 = vpack.c.bf16 %v594, %v593
    %v596 = vlaneseq
    %v597 = vshrl.u32 %v596, 7
    %v598 = vsub.s32 2, %v597
    %v599 = vrot.slane %v552, %v598
    %v604 = vunpack.c.l.b16 %v544
    %v605 = vunpack.c.l.b16 %v546
    %v606 = vunpack.c.l.b16 %v548
    %v607 = vunpack.c.l.b16 %v550
    %v608 = vpack.c.b16 %v605, %v604
    %v609 = vpack.c.b16 %v607, %v606
    %v613 = vsel %vm89, %v595, 0
    %615 = vmatprep.subr.bf16.mxu0 0
    %616 = vmatpush1.bf16.msra.mxu0 0
    %617 = vmatprep.subr.bf16.mxu0 0
    %618 = vmatpush1.bf16.msra.mxu0 0
    %619 = vmatprep.subr.bf16.mxu0 0
    %620 = vmatpush1.bf16.msra.mxu0 0
    %621 = vmatprep.subr.bf16.mxu0 0
    %622 = vmatpush1.bf16.msra.mxu0 0
    %623 = vmatprep.subr.bf16.mxu0 0
    %624 = vmatpush1.bf16.msra.mxu0 0
    %625 = vmatprep.subr.bf16.mxu0 0
    %626 = vmatpush1.bf16.msra.mxu0 0
    %627 = vmatprep.subr.bf16.mxu0 0
    %628 = vmatpush1.bf16.msra.mxu0 %v609
    %629 = vmatprep.subr.bf16.mxu0 0
    %630 = vmatpush1.bf16.msra.mxu0 %v608
    %631 = vmatprep.subr.bf16.mxu0 0
    %632 = vmatpush2.bf16.msra.mxu0 0
    %633 = vmatprep.subr.bf16.mxu0 0
    %634 = vmatpush2.bf16.msra.mxu0 0
    %635 = vmatprep.subr.bf16.mxu0 0
    %636 = vmatpush2.bf16.msra.mxu0 0
    %637 = vmatprep.subr.bf16.mxu0 0
    %638 = vmatpush2.bf16.msra.mxu0 0
    %639 = vmatprep.subr.bf16.mxu0 0
    %640 = vmatpush2.bf16.msra.mxu0 0
    %641 = vmatprep.subr.bf16.mxu0 0
    %642 = vmatpush2.bf16.msra.mxu0 0
    %643 = vmatprep.subr.bf16.mxu0 0
    %644 = vmatpush2.bf16.msra.mxu0 0
    %645 = vmatprep.subr.bf16.mxu0 0
    %646 = vmatpush2.bf16.msra.mxu0 0
    %647 = vmatprep.mubr.bf16.mxu0 0
    %648 = vmatmul.mubr.bf16.gmra.mxu0 %v613
    %v649 = vpop.f32.mrf.mxu0
    %v650 = vadd.f32 %v599, %v649
    %v651 = vpop.f32.mrf.mxu0
    %v652 = vpop.f32.mrf.mxu0
    %v653 = vadd.f32 %v599, %v652
    %v654 = vpop.f32.mrf.mxu0
    %655 = vdwg.mxu0
    %v656 = vpack.c.bf16 %v653, %v650
    %658 = vrot.lane.b32.xlu0 %v656, 96
    %v659 = vpop.permute.xlu0 %658
    %v661 = vsel %vm89, %v656, 0
    %v664 = vsel %vm89, %v659, 0
    %666 = vmatprep.subr.bf16.mxu0 0
    %667 = vmatpush1.bf16.xpose.msra.mxu0 0
    %668 = vmatprep.subr.bf16.mxu0 0
    %669 = vmatpush1.bf16.xpose.msra.mxu0 0
    %670 = vmatprep.subr.bf16.mxu0 0
    %671 = vmatpush1.bf16.xpose.msra.mxu0 0
    %672 = vmatprep.subr.bf16.mxu0 0
    %673 = vmatpush1.bf16.xpose.msra.mxu0 0
    %674 = vmatprep.subr.bf16.mxu0 0
    %675 = vmatpush1.bf16.xpose.msra.mxu0 0
    %676 = vmatprep.subr.bf16.mxu0 0
    %677 = vmatpush1.bf16.xpose.msra.mxu0 0
    %678 = vmatprep.subr.bf16.mxu0 0
    %679 = vmatpush1.bf16.xpose.msra.mxu0 0
    %680 = vmatprep.subr.bf16.mxu0 0
    %681 = vmatpush1.bf16.xpose.msra.mxu0 %v664
    %682 = vmatprep.subr.bf16.mxu0 0
    %683 = vmatpush2.bf16.xpose.msra.mxu0 0
    %684 = vmatprep.subr.bf16.mxu0 0
    %685 = vmatpush2.bf16.xpose.msra.mxu0 0
    %686 = vmatprep.subr.bf16.mxu0 0
    %687 = vmatpush2.bf16.xpose.msra.mxu0 0
    %688 = vmatprep.subr.bf16.mxu0 0
    %689 = vmatpush2.bf16.xpose.msra.mxu0 0
    %690 = vmatprep.subr.bf16.mxu0 0
    %691 = vmatpush2.bf16.xpose.msra.mxu0 0
    %692 = vmatprep.subr.bf16.mxu0 0
    %693 = vmatpush2.bf16.xpose.msra.mxu0 0
    %694 = vmatprep.subr.bf16.mxu0 0
    %695 = vmatpush2.bf16.xpose.msra.mxu0 0
    %696 = vmatprep.subr.bf16.mxu0 0
    %697 = vmatpush2.bf16.xpose.msra.mxu0 0
    %698 = vmatprep.mubr.bf16.mxu0 0
    %699 = vmatmul.mubr.bf16.gmra.mxu0 %v661
    %v700 = vpop.f32.mrf.mxu0
    %v701 = vadd.f32 0.0, %v700
    %v702 = vpop.f32.mrf.mxu0
    %v703 = vpop.f32.mrf.mxu0
    %v704 = vadd.f32 0.0, %v703
    %v705 = vpop.f32.mrf.mxu0
    %706 = vdwg.mxu0
    %v707 = vmul.f32 %v701, 0.17677669
    %v708 = vmul.f32 %v704, 0.17677669
    %v709 = vsel %vm74, %v707, -1e+30
    %v710 = vsel %vm75, %v708, -1e+30
    %v711 = vsel %vm249, %v709, -inf
    %712 = vmax.xlane.f32.xlu0 %v711
    %v713 = vpop.xlane.xlu0 %712
    %v714 = vsel %vm249, %v710, -inf
    %715 = vmax.xlane.f32.xlu0 %v714
    %v716 = vpop.xlane.xlu0 %715
    %v717 = vsub.f32 %v709, %v713
    %v718 = vsub.f32 %v710, %v716
    %v719 = vmul.f32 %v717, 1.442695
    %v720 = vpow.pop %v719
    %v721 = vmul.f32 %v718, 1.442695
    %v722 = vpow.pop %v721
    %v723 = vsel %vm249, %v720, 0.0
    %724 = vadd.xlane.f32.xlu0 %v723
    %v725 = vpop.xlane.xlu0 %724
    %v726 = vsel %vm249, %v722, 0.0
    %727 = vadd.xlane.f32.xlu0 %v726
    %v728 = vpop.xlane.xlu0 %727
    %v729 = vrcp.pop %v725
    %v730 = vrcp.pop %v728
    %v731 = vmul.f32 %v720, %v729
    %v732 = vmul.f32 %v722, %v730
    %v733 = vpack.c.bf16 %v732, %v731
    %734 = vrot.lane.b32.xlu0 %v656, 64
    %v735 = vpop.permute.xlu0 %734
    %v738 = vsel %vm249, %v733, 0
    %740 = vmatprep.subr.bf16.mxu0 0
    %741 = vmatpush1.bf16.msra.mxu0 0
    %742 = vmatprep.subr.bf16.mxu0 0
    %743 = vmatpush1.bf16.msra.mxu0 0
    %744 = vmatprep.subr.bf16.mxu0 0
    %745 = vmatpush1.bf16.msra.mxu0 0
    %746 = vmatprep.subr.bf16.mxu0 0
    %747 = vmatpush1.bf16.msra.mxu0 0
    %748 = vmatprep.subr.bf16.mxu0 0
    %749 = vmatpush1.bf16.msra.mxu0 0
    %750 = vmatprep.subr.bf16.mxu0 0
    %751 = vmatpush1.bf16.msra.mxu0 0
    %752 = vmatprep.subr.bf16.mxu0 0
    %753 = vmatpush1.bf16.msra.mxu0 0
    %754 = vmatprep.subr.bf16.mxu0 0
    %755 = vmatpush1.bf16.msra.mxu0 %v735
    %756 = vmatprep.subr.bf16.mxu0 0
    %757 = vmatpush2.bf16.msra.mxu0 0
    %758 = vmatprep.subr.bf16.mxu0 0
    %759 = vmatpush2.bf16.msra.mxu0 0
    %760 = vmatprep.subr.bf16.mxu0 0
    %761 = vmatpush2.bf16.msra.mxu0 0
    %762 = vmatprep.subr.bf16.mxu0 0
    %763 = vmatpush2.bf16.msra.mxu0 0
    %764 = vmatprep.subr.bf16.mxu0 0
    %765 = vmatpush2.bf16.msra.mxu0 0
    %766 = vmatprep.subr.bf16.mxu0 0
    %767 = vmatpush2.bf16.msra.mxu0 0
    %768 = vmatprep.subr.bf16.mxu0 0
    %769 = vmatpush2.bf16.msra.mxu0 0
    %770 = vmatprep.subr.bf16.mxu0 0
    %771 = vmatpush2.bf16.msra.mxu0 0
    %772 = vmatprep.mubr.bf16.mxu0 0
    %773 = vmatmul.mubr.bf16.gmra.mxu0 %v738
    %v774 = vpop.f32.mrf.mxu0
    %v775 = vadd.f32 0.0, %v774
    %v776 = vpop.f32.mrf.mxu0
    %v777 = vpop.f32.mrf.mxu0
    %v778 = vadd.f32 0.0, %v777
    %v779 = vpop.f32.mrf.mxu0
    %780 = vdwg.mxu0
    %v781 = vpack.c.bf16 %v778, %v775
    %v782 = vlaneseq
    %v783 = vshrl.u32 %v782, 7
    %v784 = vsub.s32 3, %v783
    %v785 = vrot.slane %v552, %v784
    %v786 = vunpack.c.h.b16 %v544
    %v787 = vunpack.c.h.b16 %v546
    %v788 = vunpack.c.h.b16 %v548
    %v789 = vunpack.c.h.b16 %v550
    %v790 = vpack.c.b16 %v787, %v786
    %v791 = vpack.c.b16 %v789, %v788
    %v795 = vsel %vm89, %v781, 0
    %797 = vmatprep.subr.bf16.mxu0 0
    %798 = vmatpush1.bf16.msra.mxu0 0
    %799 = vmatprep.subr.bf16.mxu0 0
    %800 = vmatpush1.bf16.msra.mxu0 0
    %801 = vmatprep.subr.bf16.mxu0 0
    %802 = vmatpush1.bf16.msra.mxu0 0
    %803 = vmatprep.subr.bf16.mxu0 0
    %804 = vmatpush1.bf16.msra.mxu0 0
    %805 = vmatprep.subr.bf16.mxu0 0
    %806 = vmatpush1.bf16.msra.mxu0 0
    %807 = vmatprep.subr.bf16.mxu0 0
    %808 = vmatpush1.bf16.msra.mxu0 0
    %809 = vmatprep.subr.bf16.mxu0 0
    %810 = vmatpush1.bf16.msra.mxu0 %v791
    %811 = vmatprep.subr.bf16.mxu0 0
    %812 = vmatpush1.bf16.msra.mxu0 %v790
    %813 = vmatprep.subr.bf16.mxu0 0
    %814 = vmatpush2.bf16.msra.mxu0 0
    %815 = vmatprep.subr.bf16.mxu0 0
    %816 = vmatpush2.bf16.msra.mxu0 0
    %817 = vmatprep.subr.bf16.mxu0 0
    %818 = vmatpush2.bf16.msra.mxu0 0
    %819 = vmatprep.subr.bf16.mxu0 0
    %820 = vmatpush2.bf16.msra.mxu0 0
    %821 = vmatprep.subr.bf16.mxu0 0
    %822 = vmatpush2.bf16.msra.mxu0 0
    %823 = vmatprep.subr.bf16.mxu0 0
    %824 = vmatpush2.bf16.msra.mxu0 0
    %825 = vmatprep.subr.bf16.mxu0 0
    %826 = vmatpush2.bf16.msra.mxu0 0
    %827 = vmatprep.subr.bf16.mxu0 0
    %828 = vmatpush2.bf16.msra.mxu0 0
    %829 = vmatprep.mubr.bf16.mxu0 0
    %830 = vmatmul.mubr.bf16.gmra.mxu0 %v795
    %v831 = vpop.f32.mrf.mxu0
    %v832 = vadd.f32 %v785, %v831
    %v833 = vpop.f32.mrf.mxu0
    %v834 = vpop.f32.mrf.mxu0
    %v835 = vadd.f32 %v785, %v834
    %v836 = vpop.f32.mrf.mxu0
    %837 = vdwg.mxu0
    %v838 = vadd.f32 %v832, %v540
    %v839 = vadd.f32 %v835, %v541
    %v840 = vsel %vm89, %v838, 0.0
    %841 = vadd.xlane.f32.xlu0 %v840
    %v842 = vpop.xlane.xlu0 %841
    %v843 = vsel %vm89, %v839, 0.0
    %844 = vadd.xlane.f32.xlu0 %v843
    %v845 = vpop.xlane.xlu0 %844
    %v846 = vmul.f32 %v842, %v96
    %v847 = vmul.f32 %v845, %v96
    %v848 = vmul.f32 %v838, %v838
    %v849 = vmul.f32 %v839, %v839
    %v850 = vsel %vm89, %v848, 0.0
    %851 = vadd.xlane.f32.xlu0 %v850
    %v852 = vpop.xlane.xlu0 %851
    %v853 = vsel %vm89, %v849, 0.0
    %854 = vadd.xlane.f32.xlu0 %v853
    %v855 = vpop.xlane.xlu0 %854
    %v856 = vmul.f32 %v852, %v96
    %v857 = vmul.f32 %v855, %v96
    %v858 = vmul.f32 %v846, %v846
    %v859 = vmul.f32 %v847, %v847
    %v860 = vsub.f32 %v856, %v858
    %v861 = vsub.f32 %v857, %v859
    %v862 = vsub.f32 %v838, %v846
    %v863 = vsub.f32 %v839, %v847
    %v864 = vadd.f32 %v860, 1e-05
    %v865 = vadd.f32 %v861, 1e-05
    %v866 = vrsqrt.pop %v864
    %v867 = vrsqrt.pop %v865
    %v868 = vmul.f32 %v862, %v866
    %v869 = vmul.f32 %v863, %v867
    %v870 = vlaneseq
    %v871 = vshrl.u32 %v870, 7
    %v872 = vsub.s32 4, %v871
    %v873 = vrot.slane %v552, %v872
    %v874 = vmul.f32 %v868, %v873
    %v875 = vmul.f32 %v869, %v873
    %v876 = vlaneseq
    %v877 = vshrl.u32 %v876, 7
    %v878 = vsub.s32 5, %v877
    %v879 = vrot.slane %v552, %v878
    %v880 = vadd.f32 %v874, %v879
    %v881 = vadd.f32 %v875, %v879
    %v882 = vpack.c.bf16 %v881, %v880
    %v883 = vlaneseq
    %v884 = vshrl.u32 %v883, 7
    %v885 = vsub.s32 6, %v884
    %v886 = vrot.slane %v552, %v885
    %v891 = vunpack.c.l.b16 %v543
    %v892 = vunpack.c.l.b16 %v545
    %v893 = vunpack.c.l.b16 %v547
    %v894 = vunpack.c.l.b16 %v549
    %v895 = vpack.c.b16 %v892, %v891
    %v896 = vpack.c.b16 %v894, %v893
    %v900 = vsel %vm89, %v882, 0
    %902 = vmatprep.subr.bf16.mxu0 0
    %903 = vmatpush1.bf16.msra.mxu0 0
    %904 = vmatprep.subr.bf16.mxu0 0
    %905 = vmatpush1.bf16.msra.mxu0 0
    %906 = vmatprep.subr.bf16.mxu0 0
    %907 = vmatpush1.bf16.msra.mxu0 0
    %908 = vmatprep.subr.bf16.mxu0 0
    %909 = vmatpush1.bf16.msra.mxu0 0
    %910 = vmatprep.subr.bf16.mxu0 0
    %911 = vmatpush1.bf16.msra.mxu0 0
    %912 = vmatprep.subr.bf16.mxu0 0
    %913 = vmatpush1.bf16.msra.mxu0 0
    %914 = vmatprep.subr.bf16.mxu0 0
    %915 = vmatpush1.bf16.msra.mxu0 %v896
    %916 = vmatprep.subr.bf16.mxu0 0
    %917 = vmatpush1.bf16.msra.mxu0 %v895
    %918 = vmatprep.subr.bf16.mxu0 0
    %919 = vmatpush2.bf16.msra.mxu0 0
    %920 = vmatprep.subr.bf16.mxu0 0
    %921 = vmatpush2.bf16.msra.mxu0 0
    %922 = vmatprep.subr.bf16.mxu0 0
    %923 = vmatpush2.bf16.msra.mxu0 0
    %924 = vmatprep.subr.bf16.mxu0 0
    %925 = vmatpush2.bf16.msra.mxu0 0
    %926 = vmatprep.subr.bf16.mxu0 0
    %927 = vmatpush2.bf16.msra.mxu0 0
    %928 = vmatprep.subr.bf16.mxu0 0
    %929 = vmatpush2.bf16.msra.mxu0 0
    %930 = vmatprep.subr.bf16.mxu0 0
    %931 = vmatpush2.bf16.msra.mxu0 0
    %932 = vmatprep.subr.bf16.mxu0 0
    %933 = vmatpush2.bf16.msra.mxu0 0
    %934 = vmatprep.mubr.bf16.mxu0 0
    %935 = vmatmul.mubr.bf16.gmra.mxu0 %v900
    %v936 = vpop.f32.mrf.mxu0
    %v937 = vadd.f32 %v886, %v936
    %v938 = vpop.f32.mrf.mxu0
    %v939 = vpop.f32.mrf.mxu0
    %v940 = vadd.f32 %v886, %v939
    %v941 = vpop.f32.mrf.mxu0
    %942 = vdwg.mxu0
    %v943 = vmax.f32 %v937, 0.0
    %v944 = vmax.f32 %v940, 0.0
    %v945 = vpack.c.bf16 %v944, %v943
    %v946 = vlaneseq
    %v947 = vshrl.u32 %v946, 7
    %v948 = vsub.s32 7, %v947
    %v949 = vrot.slane %v552, %v948
    %v950 = vunpack.c.h.b16 %v543
    %v951 = vunpack.c.h.b16 %v545
    %v952 = vunpack.c.h.b16 %v547
    %v953 = vunpack.c.h.b16 %v549
    %v954 = vpack.c.b16 %v951, %v950
    %v955 = vpack.c.b16 %v953, %v952
    %958 = vmatprep.subr.bf16.mxu0 0
    %959 = vmatpush1.bf16.xpose.msra.mxu0 0
    %960 = vmatprep.subr.bf16.mxu0 0
    %961 = vmatpush1.bf16.xpose.msra.mxu0 0
    %962 = vmatprep.subr.bf16.mxu0 0
    %963 = vmatpush1.bf16.xpose.msra.mxu0 0
    %964 = vmatprep.subr.bf16.mxu0 0
    %965 = vmatpush1.bf16.xpose.msra.mxu0 0
    %966 = vmatprep.subr.bf16.mxu0 0
    %967 = vmatpush1.bf16.xpose.msra.mxu0 0
    %968 = vmatprep.subr.bf16.mxu0 0
    %969 = vmatpush1.bf16.xpose.msra.mxu0 0
    %970 = vmatprep.subr.bf16.mxu0 0
    %971 = vmatpush1.bf16.xpose.msra.mxu0 %v955
    %972 = vmatprep.subr.bf16.mxu0 0
    %973 = vmatpush1.bf16.xpose.msra.mxu0 %v954
    %974 = vmatprep.subr.bf16.mxu0 0
    %975 = vmatpush2.bf16.xpose.msra.mxu0 0
    %976 = vmatprep.subr.bf16.mxu0 0
    %977 = vmatpush2.bf16.xpose.msra.mxu0 0
    %978 = vmatprep.subr.bf16.mxu0 0
    %979 = vmatpush2.bf16.xpose.msra.mxu0 0
    %980 = vmatprep.subr.bf16.mxu0 0
    %981 = vmatpush2.bf16.xpose.msra.mxu0 0
    %982 = vmatprep.subr.bf16.mxu0 0
    %983 = vmatpush2.bf16.xpose.msra.mxu0 0
    %984 = vmatprep.subr.bf16.mxu0 0
    %985 = vmatpush2.bf16.xpose.msra.mxu0 0
    %986 = vmatprep.subr.bf16.mxu0 0
    %987 = vmatpush2.bf16.xpose.msra.mxu0 0
    %988 = vmatprep.subr.bf16.mxu0 0
    %989 = vmatpush2.bf16.xpose.msra.mxu0 0
    %990 = vmatprep.mubr.bf16.mxu0 0
    %991 = vmatmul.mubr.bf16.gmra.mxu0 %v945
    %v992 = vpop.f32.mrf.mxu0
    %v993 = vadd.f32 %v949, %v992
    %v994 = vpop.f32.mrf.mxu0
    %v995 = vpop.f32.mrf.mxu0
    %v996 = vadd.f32 %v949, %v995
    %v997 = vpop.f32.mrf.mxu0
    %998 = vdwg.mxu0
    %v999 = vadd.f32 %v838, %v880
    %v1000 = vadd.f32 %v839, %v881
    %v1001 = vadd.f32 %v999, %v993
    %v1002 = vadd.f32 %v1000, %v996
    %v1004 = vsel %vm249, %v79, 0
    %1006 = vmatprep.subr.mxu0 0.0
    %1007 = vmatpush1.msra.mxu0 0.0
    %1008 = vmatprep.subr.mxu0 0.0
    %1009 = vmatpush1.msra.mxu0 0.0
    %1010 = vmatprep.subr.mxu0 0.0
    %1011 = vmatpush1.msra.mxu0 0.0
    %1012 = vmatprep.subr.mxu0 0.0
    %1013 = vmatpush1.msra.mxu0 0.0
    %1014 = vmatprep.subr.mxu0 0.0
    %1015 = vmatpush1.msra.mxu0 0.0
    %1016 = vmatprep.subr.mxu0 0.0
    %1017 = vmatpush1.msra.mxu0 0.0
    %1018 = vmatprep.subr.mxu0 0.0
    %1019 = vmatpush1.msra.mxu0 0.0
    %1020 = vmatprep.subr.mxu0 0.0
    %1021 = vmatpush1.msra.mxu0 0.0
    %1022 = vmatprep.subr.mxu0 0.0
    %1023 = vmatpush1.msra.mxu0 0.0
    %1024 = vmatprep.subr.mxu0 0.0
    %1025 = vmatpush1.msra.mxu0 0.0
    %1026 = vmatprep.subr.mxu0 0.0
    %1027 = vmatpush1.msra.mxu0 0.0
    %1028 = vmatprep.subr.mxu0 0.0
    %1029 = vmatpush1.msra.mxu0 0.0
    %1030 = vmatprep.subr.mxu0 0.0
    %1031 = vmatpush1.msra.mxu0 0.0
    %1032 = vmatprep.subr.mxu0 0.0
    %1033 = vmatpush1.msra.mxu0 0.0
    %1034 = vmatprep.subr.mxu0 0.0
    %1035 = vmatpush1.msra.mxu0 %v1002
    %1036 = vmatprep.subr.mxu0 0.0
    %1037 = vmatpush1.msra.mxu0 %v1001
    %1038 = vmatprep.subr.mxu0 0.0
    %1039 = vmatpush2.msra.mxu0 0.0
    %1040 = vmatprep.subr.mxu0 0.0
    %1041 = vmatpush2.msra.mxu0 0.0
    %1042 = vmatprep.subr.mxu0 0.0
    %1043 = vmatpush2.msra.mxu0 0.0
    %1044 = vmatprep.subr.mxu0 0.0
    %1045 = vmatpush2.msra.mxu0 0.0
    %1046 = vmatprep.subr.mxu0 0.0
    %1047 = vmatpush2.msra.mxu0 0.0
    %1048 = vmatprep.subr.mxu0 0.0
    %1049 = vmatpush2.msra.mxu0 0.0
    %1050 = vmatprep.subr.mxu0 0.0
    %1051 = vmatpush2.msra.mxu0 0.0
    %1052 = vmatprep.subr.mxu0 0.0
    %1053 = vmatpush2.msra.mxu0 0.0
    %1054 = vmatprep.subr.mxu0 0.0
    %1055 = vmatpush2.msra.mxu0 0.0
    %1056 = vmatprep.subr.mxu0 0.0
    %1057 = vmatpush2.msra.mxu0 0.0
    %1058 = vmatprep.subr.mxu0 0.0
    %1059 = vmatpush2.msra.mxu0 0.0
    %1060 = vmatprep.subr.mxu0 0.0
    %1061 = vmatpush2.msra.mxu0 0.0
    %1062 = vmatprep.subr.mxu0 0.0
    %1063 = vmatpush2.msra.mxu0 0.0
    %1064 = vmatprep.subr.mxu0 0.0
    %1065 = vmatpush2.msra.mxu0 0.0
    %1066 = vmatprep.subr.mxu0 0.0
    %1067 = vmatpush2.msra.mxu0 0.0
    %1068 = vmatprep.subr.mxu0 0.0
    %1069 = vmatpush2.msra.mxu0 0.0
    %1070 = vmatprep.mubr.f32.mxu0 0.0
    %1071 = vmatmul.mubr.f32.gmra.mxu0 %v1004
    %v1072 = vpop.f32.mrf.mxu0
    %v1073 = vadd.f32 0.0, %v1072
    %v1074 = vpop.f32.mrf.mxu0
    %1075 = vdwg.mxu0
    %1076 = vst.msk [vmem:[#allocation8] sm:$0xff] %vm89, %v1073
    // Predicated region
    $region26: #{bert_feature_extraction.1} parent=1 // pred_check
      _
    $region27: #{bert_feature_extraction.1} parent=1 // pred_check_branch
      %1078 = sbr.rel (0) target = $region29
    $region28: #{bert_feature_extraction.1} parent=1 // pred_region
      %s1080 = ssub.s32 128, 128
      %1081 = vsyncadd [#allocation4], %s1080
      %s1083 = sshll.u32 [#allocation8], 4
      %s1084 = int_to_ptr.vmem [resolvable:$true] %s1083
      %1086 = dma.vmem_to_hbm [thread:$0]  %s1084, 128, %s3, [#allocation4]
    $region29: #{bert_feature_extraction.1} parent=1 // pred_fallthru
      _
    // Predicated region
    $region30: #{bert_feature_extraction.1} parent=1 // pred_check
      _
    $region31: #{bert_feature_extraction.1} parent=1 // pred_check_branch
      %1088 = sbr.rel (0) target = $region33
    $region32: #{bert_feature_extraction.1} parent=1 // pred_region
      %1089 = dma.done [#allocation4], 128
    $region33: #{bert_feature_extraction.1} parent=1 // pred_fallthru
      _
    %1090 = vsyncpa [#allocation3], 1
    %1091 = vsyncpa [#allocation6], 1
    %1092 = vsyncpa [#allocation4], 1

</llo_original>
